<compile_context>
chip_gen: v7x
topology: tpu7x:2x2x1
jax: 0.10.0
libtpu: 0.0.40
codegen_flags: <defaults>
</compile_context>

<pallas_src>
import jax
import jax.numpy as jnp
from jax.experimental import pallas as pl
from jax.experimental.pallas import tpu as pltpu


def _self_attention_kernel(xz_ref, qz_ref, wkz_ref, bkz_ref, wvz_ref, bvz_ref, o_ref):
    """Single grid step over the whole batched problem.

    Shapes (Z = B * n_heads, D = C // n_heads):
      xz_ref : (Z, T, C)  x replicated per head (projection input)
      qz_ref : (Z, T, D)  head-split x (query = Identity)
      wkz/wvz: (Z, C, D)  per-head projection weights (replicated over batch)
      bkz/bvz: (Z, 1, D)  per-head biases
      o_ref  : (Z, T, D)  per-head attention output (heads merged in wrapper)
    """
    xz = xz_ref[...]
    q = qz_ref[...]

    # Key / value projections for all (batch, head) pairs as one batched
    # contraction each -- result lands directly in head-major layout, no
    # lane-offset slicing inside the kernel.
    k = jnp.einsum("ztc,zcd->ztd", xz, wkz_ref[...],
                   preferred_element_type=jnp.float32) + bkz_ref[...]
    v = jnp.einsum("ztc,zcd->ztd", xz, wvz_ref[...],
                   preferred_element_type=jnp.float32) + bvz_ref[...]

    # logits = key @ query^T (key-first, unscaled -- exactly as in the module).
    logits = jnp.einsum("ztd,zsd->zts", k, q,
                        preferred_element_type=jnp.float32)

    Z, T, _ = logits.shape
    key_pos = jax.lax.broadcasted_iota(jnp.int32, (Z, T, T), 1)   # row  = key pos
    qry_pos = jax.lax.broadcasted_iota(jnp.int32, (Z, T, T), 2)   # col  = query pos
    # tril mask: keep col <= row; large finite negative so exp underflows to 0
    # (avoids -inf - -inf NaN hazards while matching masked_fill(-inf) exactly).
    masked = jnp.where(qry_pos <= key_pos, logits, jnp.float32(-1e30))

    # Numerically-stable softmax; EXACT divide (approx reciprocal was the
    # source of the previous accuracy failure and buys nothing at this size).
    m = jnp.max(masked, axis=-1, keepdims=True)
    p = jnp.exp(masked - m)
    l = jnp.sum(p, axis=-1, keepdims=True)
    att = p / l

    y = jnp.einsum("zts,zsd->ztd", att, v, preferred_element_type=jnp.float32)

    # Single bulk store of the whole output block (no per-head narrow stores).
    o_ref[...] = y.astype(o_ref.dtype)


def self_attention(x, wk, bk, wv, bv, n_heads):
    """x: (B, T, C); wk/wv: (C, C) in (in, out) layout; bk/bv: (1, C) or (C,)."""
    B, T, C = x.shape
    H = n_heads
    assert C % H == 0
    D = C // H
    Z = B * H

    # --- wrapper-side layout plumbing (no compute hoisted out of the kernel) ---
    # query = Identity(x), split into heads -> (Z, T, D)
    qz = x.reshape(B, T, H, D).transpose(0, 2, 1, 3).reshape(Z, T, D)
    # x replicated per head so in-kernel projections are 3-D batched dots.
    xz = jnp.broadcast_to(x[:, None], (B, H, T, C)).reshape(Z, T, C)
    # per-head weight / bias views, replicated over batch (few KB total).
    wkh = wk.reshape(C, H, D).transpose(1, 0, 2)                       # (H, C, D)
    wvh = wv.reshape(C, H, D).transpose(1, 0, 2)                       # (H, C, D)
    wkz = jnp.broadcast_to(wkh[None], (B, H, C, D)).reshape(Z, C, D)
    wvz = jnp.broadcast_to(wvh[None], (B, H, C, D)).reshape(Z, C, D)
    bkz = jnp.broadcast_to(bk.reshape(H, D)[None, :, None, :],
                           (B, H, 1, D)).reshape(Z, 1, D)
    bvz = jnp.broadcast_to(bv.reshape(H, D)[None, :, None, :],
                           (B, H, 1, D)).reshape(Z, 1, D)

    def full(shape):
        # whole-array block (block_shape == array shape satisfies the tiling rule)
        return pl.BlockSpec(shape, lambda i, _s=shape: (0,) * len(_s))

    yz = pl.pallas_call(
        _self_attention_kernel,
        out_shape=jax.ShapeDtypeStruct((Z, T, D), x.dtype),
        grid=(1,),                                    # whole problem, one step
        in_specs=[
            full((Z, T, C)),   # xz
            full((Z, T, D)),   # qz
            full((Z, C, D)),   # wkz
            full((Z, 1, D)),   # bkz
            full((Z, C, D)),   # wvz
            full((Z, 1, D)),   # bvz
        ],
        out_specs=full((Z, T, D)),
        compiler_params=pltpu.CompilerParams(dimension_semantics=("arbitrary",)),
    )(xz, qz, wkz, bkz, wvz, bvz)

    # merge heads back: (Z,T,D) -> (B,H,T,D) -> (B,T,H,D) -> (B,T,C)
    return yz.reshape(B, H, T, D).transpose(0, 2, 1, 3).reshape(B, T, C)


def _reference(x, wk, bk, wv, bv, n_heads):
    """Pure-JAX mirror of the PyTorch forward (fp32 ground truth, HIGHEST precision)."""
    hp = jax.lax.Precision.HIGHEST
    B, T, C = x.shape
    D = C // n_heads
    k = jnp.einsum("btc,cd->btd", x, wk, precision=hp) + bk
    v = jnp.einsum("btc,cd->btd", x, wv, precision=hp) + bv
    q = x

    def split(z):
        return z.reshape(B, T, n_heads, D).transpose(0, 2, 1, 3)  # (B, H, T, D)

    k, q, v = split(k), split(q), split(v)
    logits = jnp.einsum("bhtd,bhsd->bhts", k, q, precision=hp)
    mask = jnp.tril(jnp.ones((T, T), dtype=bool))
    masked = jnp.where(mask[None, None], logits, -jnp.inf)
    att = jax.nn.softmax(masked, axis=-1)
    y = jnp.einsum("bhts,bhsd->bhtd", att, v, precision=hp)
    return y.transpose(0, 2, 1, 3).reshape(B, T, C)


if __name__ == "__main__":
    # config: embedding_dim=32, n_heads=4, context_length=8
    B, T, C, H = 2, 8, 32, 4

    key = jax.random.PRNGKey(0)
    kx, kwk, kbk, kwv, kbv = jax.random.split(key, 5)
    x = jax.random.normal(kx, (B, T, C), dtype=jnp.float32)
    # Deterministic synthetic parameters (Linear weights in (in, out) layout).
    wk = jax.random.normal(kwk, (C, C), dtype=jnp.float32) * 0.1
    bk = jax.random.normal(kbk, (1, C), dtype=jnp.float32) * 0.1
    wv = jax.random.normal(kwv, (C, C), dtype=jnp.float32) * 0.1
    bv = jax.random.normal(kbv, (1, C), dtype=jnp.float32) * 0.1

    out = self_attention(x, wk, bk, wv, bv, H)
    out = jax.block_until_ready(out)

    ref = _reference(x, wk, bk, wv, bv, H)
    assert out.shape == x.shape

    err = float(jnp.max(jnp.abs(out - ref)))
    # 2e-2 tolerance: comfortably tight for fp32-accurate paths (observed err
    # ~1e-6), while still covering the worst case where one side's fp32 matmul
    # takes a single-pass bf16 MXU route; it still catches any semantic bug
    # (head order / mask direction / key-first logits), which show O(0.1-1) diffs.
    assert jnp.allclose(out, ref, rtol=2e-2, atol=2e-2), (
        f"kernel does not match reference (max abs err = {err})")
    print("KERNEL_OK")
</pallas_src>

<mosaic_0001>
module attributes {stable_mosaic.version = 11 : i64} {
  func.func @_self_attention_kernel(%arg0: i32, %arg1: memref<8x8x32xf32, #tpu.memory_space<vmem>>, %arg2: memref<8x8x8xf32, #tpu.memory_space<vmem>>, %arg3: memref<8x32x8xf32, #tpu.memory_space<vmem>>, %arg4: memref<8x1x8xf32, #tpu.memory_space<vmem>>, %arg5: memref<8x32x8xf32, #tpu.memory_space<vmem>>, %arg6: memref<8x1x8xf32, #tpu.memory_space<vmem>>, %arg7: memref<8x8x8xf32, #tpu.memory_space<vmem>>) attributes {dimension_semantics = [#tpu.dimension_semantics<arbitrary>], iteration_bounds = array<i64: 1>, scalar_prefetch = 0 : i64, scratch_operands = 0 : i64, tpu.core_type = #tpu.core_type<tc>, window_params = [{pipeline_mode = #tpu.pipeline_mode<synchronous>, transform_indices = @transform_0, window_bounds = array<i64: 8, 8, 32>}, {pipeline_mode = #tpu.pipeline_mode<synchronous>, transform_indices = @transform_1, window_bounds = array<i64: 8, 8, 8>}, {pipeline_mode = #tpu.pipeline_mode<synchronous>, transform_indices = @transform_2, window_bounds = array<i64: 8, 32, 8>}, {pipeline_mode = #tpu.pipeline_mode<synchronous>, transform_indices = @transform_3, window_bounds = array<i64: 8, 1, 8>}, {pipeline_mode = #tpu.pipeline_mode<synchronous>, transform_indices = @transform_4, window_bounds = array<i64: 8, 32, 8>}, {pipeline_mode = #tpu.pipeline_mode<synchronous>, transform_indices = @transform_5, window_bounds = array<i64: 8, 1, 8>}, {pipeline_mode = #tpu.pipeline_mode<synchronous>, transform_indices = @transform_6, window_bounds = array<i64: 8, 8, 8>}]} {
    %c0 = arith.constant 0 : index
    %c0_0 = arith.constant 0 : index
    %c0_1 = arith.constant 0 : index
    %0 = vector.load %arg1[%c0, %c0_0, %c0_1] : memref<8x8x32xf32, #tpu.memory_space<vmem>>, vector<8x8x32xf32>
    %c0_2 = arith.constant 0 : index
    %c0_3 = arith.constant 0 : index
    %c0_4 = arith.constant 0 : index
    %1 = vector.load %arg2[%c0_2, %c0_3, %c0_4] : memref<8x8x8xf32, #tpu.memory_space<vmem>>, vector<8x8x8xf32>
    %c0_5 = arith.constant 0 : index
    %c0_6 = arith.constant 0 : index
    %c0_7 = arith.constant 0 : index
    %2 = vector.load %arg3[%c0_5, %c0_6, %c0_7] : memref<8x32x8xf32, #tpu.memory_space<vmem>>, vector<8x32x8xf32>
    "tpu.trace_start"() <{level = 10 : i32, message = "ztc,zcd->ztd"}> : () -> ()
    %cst = arith.constant dense<0.000000e+00> : vector<8x8x8xf32>
    %3 = tpu.matmul %0, %2, %cst {dimension_numbers = #tpu.dot_dimension_numbers<[2], [1], [1], [2], [0, 0, 0, 1, 1, 2], [0], [0]>} : vector<8x8x32xf32>, vector<8x32x8xf32>, vector<8x8x8xf32> -> vector<8x8x8xf32>
    "tpu.trace_stop"() : () -> ()
    %c0_8 = arith.constant 0 : index
    %c0_9 = arith.constant 0 : index
    %c0_10 = arith.constant 0 : index
    %4 = vector.load %arg4[%c0_8, %c0_9, %c0_10] : memref<8x1x8xf32, #tpu.memory_space<vmem>>, vector<8x1x8xf32>
    %5 = vector.broadcast %4 : vector<8x1x8xf32> to vector<8x8x8xf32>
    %6 = arith.addf %3, %5 : vector<8x8x8xf32>
    %c0_11 = arith.constant 0 : index
    %c0_12 = arith.constant 0 : index
    %c0_13 = arith.constant 0 : index
    %7 = vector.load %arg5[%c0_11, %c0_12, %c0_13] : memref<8x32x8xf32, #tpu.memory_space<vmem>>, vector<8x32x8xf32>
    "tpu.trace_start"() <{level = 10 : i32, message = "ztc,zcd->ztd"}> : () -> ()
    %cst_14 = arith.constant dense<0.000000e+00> : vector<8x8x8xf32>
    %8 = tpu.matmul %0, %7, %cst_14 {dimension_numbers = #tpu.dot_dimension_numbers<[2], [1], [1], [2], [0, 0, 0, 1, 1, 2], [0], [0]>} : vector<8x8x32xf32>, vector<8x32x8xf32>, vector<8x8x8xf32> -> vector<8x8x8xf32>
    "tpu.trace_stop"() : () -> ()
    %c0_15 = arith.constant 0 : index
    %c0_16 = arith.constant 0 : index
    %c0_17 = arith.constant 0 : index
    %9 = vector.load %arg6[%c0_15, %c0_16, %c0_17] : memref<8x1x8xf32, #tpu.memory_space<vmem>>, vector<8x1x8xf32>
    %10 = vector.broadcast %9 : vector<8x1x8xf32> to vector<8x8x8xf32>
    %11 = arith.addf %8, %10 : vector<8x8x8xf32>
    "tpu.trace_start"() <{level = 10 : i32, message = "ztd,zsd->zts"}> : () -> ()
    %cst_18 = arith.constant dense<0.000000e+00> : vector<8x8x8xf32>
    %12 = tpu.matmul %6, %1, %cst_18 {dimension_numbers = #tpu.dot_dimension_numbers<[2], [2], [1], [1], [0, 0, 0, 1, 1, 1], [0], [0]>} : vector<8x8x8xf32>, vector<8x8x8xf32>, vector<8x8x8xf32> -> vector<8x8x8xf32>
    "tpu.trace_stop"() : () -> ()
    %13 = tpu.iota {dimensions = array<i32: 1>} : vector<8x8x8xi32>
    %14 = tpu.iota {dimensions = array<i32: 2>} : vector<8x8x8xi32>
    %15 = arith.cmpi sle, %14, %13 : vector<8x8x8xi32>
    %cst_19 = arith.constant -1.000000e+30 : f32
    %16 = vector.broadcast %cst_19 : f32 to vector<8x8x8xf32>
    %17 = arith.select %15, %12, %16 : vector<8x8x8xi1>, vector<8x8x8xf32>
    %cst_20 = arith.constant dense<0xFF800000> : vector<8x8xf32>
    %18 = vector.multi_reduction <maximumf>, %17, %cst_20 [2] : vector<8x8x8xf32> to vector<8x8xf32>
    %19 = vector.shape_cast %18 : vector<8x8xf32> to vector<8x8x1xf32>
    %20 = vector.broadcast %19 : vector<8x8x1xf32> to vector<8x8x8xf32>
    %21 = arith.subf %17, %20 : vector<8x8x8xf32>
    %22 = math.exp %21 : vector<8x8x8xf32>
    %cst_21 = arith.constant dense<0.000000e+00> : vector<8x8xf32>
    %23 = vector.multi_reduction <add>, %22, %cst_21 [2] : vector<8x8x8xf32> to vector<8x8xf32>
    %24 = vector.shape_cast %23 : vector<8x8xf32> to vector<8x8x1xf32>
    %25 = vector.broadcast %24 : vector<8x8x1xf32> to vector<8x8x8xf32>
    %26 = arith.divf %22, %25 : vector<8x8x8xf32>
    "tpu.trace_start"() <{level = 10 : i32, message = "zts,zsd->ztd"}> : () -> ()
    %cst_22 = arith.constant dense<0.000000e+00> : vector<8x8x8xf32>
    %27 = tpu.matmul %26, %11, %cst_22 {dimension_numbers = #tpu.dot_dimension_numbers<[2], [1], [1], [2], [0, 0, 0, 1, 1, 2], [0], [0]>} : vector<8x8x8xf32>, vector<8x8x8xf32>, vector<8x8x8xf32> -> vector<8x8x8xf32>
    "tpu.trace_stop"() : () -> ()
    %c0_23 = arith.constant 0 : index
    %c0_24 = arith.constant 0 : index
    %c0_25 = arith.constant 0 : index
    %28 = vector.load %arg7[%c0_23, %c0_24, %c0_25] : memref<8x8x8xf32, #tpu.memory_space<vmem>>, vector<8x8x8xf32>
    tpu.vector_store %arg7[%c0_23, %c0_24, %c0_25], %27 {strides = array<i32>} : memref<8x8x8xf32, #tpu.memory_space<vmem>>, vector<8x8x8xf32>,
    return
  }
  func.func @transform_0(%arg0: i32) -> (i32, i32, i32) {
    %c0_i32 = arith.constant 0 : i32
    %c0_i32_0 = arith.constant 0 : i32
    %c0_i32_1 = arith.constant 0 : i32
    %c0_i32_2 = arith.constant 0 : i32
    return %c0_i32, %c0_i32_0, %c0_i32_1 : i32, i32, i32
  }
  func.func @transform_1(%arg0: i32) -> (i32, i32, i32) {
    %c0_i32 = arith.constant 0 : i32
    %c0_i32_0 = arith.constant 0 : i32
    %c0_i32_1 = arith.constant 0 : i32
    %c0_i32_2 = arith.constant 0 : i32
    return %c0_i32, %c0_i32_0, %c0_i32_1 : i32, i32, i32
  }
  func.func @transform_2(%arg0: i32) -> (i32, i32, i32) {
    %c0_i32 = arith.constant 0 : i32
    %c0_i32_0 = arith.constant 0 : i32
    %c0_i32_1 = arith.constant 0 : i32
    %c0_i32_2 = arith.constant 0 : i32
    return %c0_i32, %c0_i32_0, %c0_i32_1 : i32, i32, i32
  }
  func.func @transform_3(%arg0: i32) -> (i32, i32, i32) {
    %c0_i32 = arith.constant 0 : i32
    %c0_i32_0 = arith.constant 0 : i32
    %c0_i32_1 = arith.constant 0 : i32
    %c0_i32_2 = arith.constant 0 : i32
    return %c0_i32, %c0_i32_0, %c0_i32_1 : i32, i32, i32
  }
  func.func @transform_4(%arg0: i32) -> (i32, i32, i32) {
    %c0_i32 = arith.constant 0 : i32
    %c0_i32_0 = arith.constant 0 : i32
    %c0_i32_1 = arith.constant 0 : i32
    %c0_i32_2 = arith.constant 0 : i32
    return %c0_i32, %c0_i32_0, %c0_i32_1 : i32, i32, i32
  }
  func.func @transform_5(%arg0: i32) -> (i32, i32, i32) {
    %c0_i32 = arith.constant 0 : i32
    %c0_i32_0 = arith.constant 0 : i32
    %c0_i32_1 = arith.constant 0 : i32
    %c0_i32_2 = arith.constant 0 : i32
    return %c0_i32, %c0_i32_0, %c0_i32_1 : i32, i32, i32
  }
  func.func @transform_6(%arg0: i32) -> (i32, i32, i32) {
    %c0_i32 = arith.constant 0 : i32
    %c0_i32_0 = arith.constant 0 : i32
    %c0_i32_1 = arith.constant 0 : i32
    %c0_i32_2 = arith.constant 0 : i32
    return %c0_i32, %c0_i32_0, %c0_i32_1 : i32, i32, i32
  }
}

</mosaic_0001>

<llo_original>
// kernel: tpu_custom_call.1
$region0: #{tpu_custom_call.1}
  #allocation0 [shape = 'u32[]', space=smem, size = 0x4, offset = 0x4, fixed_abs, tag = 'smem constant byte address 0x4 - core index']
  #allocation1 [shape = 'u32[144,128]{1,0:T(1,128)}', space=vmem, size = 0x12000, scoped, tag = 'internal scratch']
  %s0 = inlined_call_operand.vmem [shape: f32[8,8,32], index: 0, kind: input, shape index: {}]
  %s1 = inlined_call_operand.vmem [shape: f32[8,8,8], index: 1, kind: input, shape index: {}]
  %s2 = inlined_call_operand.vmem [shape: f32[8,32,8], index: 2, kind: input, shape index: {}]
  %s3 = inlined_call_operand.vmem [shape: f32[8,1,8], index: 3, kind: input, shape index: {}]
  %s4 = inlined_call_operand.vmem [shape: f32[8,32,8], index: 4, kind: input, shape index: {}]
  %s5 = inlined_call_operand.vmem [shape: f32[8,1,8], index: 5, kind: input, shape index: {}]
  %s6 = inlined_call_operand.hbm [shape: f32[8,8,8], index: 6, kind: output, shape index: {}]
  %s7 = sld [smem:[#allocation0]]
  $region34: #{tpu_custom_call.1} parent=0
    _
  %s9 = ssub.s32 1, %s7
  %s10 = scalar_select 0, %s9, %s7
  $region1: #{tpu_custom_call.1} parent=0
    #allocation2 [shape = 'u8[32768]{0}', space=vmem, size = 0x8000, scoped, tag = 'output window, operand 0, single buffered']
    #allocation3 [shape = 's32[1]{0}', space=sflag, size = 0x4, scoped, tag = 'scoped memory for tpu_custom_call.1']
    %11 = vsyncpa [#allocation3], 0
    // Predicated region
    $region2: #{tpu_custom_call.1} parent=1 // pred_check
      _
    $region3: #{tpu_custom_call.1} parent=1 // pred_check_branch
      %13 = sbr.rel (0) target = $region5
    $region4: #{tpu_custom_call.1} parent=1 // pred_region
      _
    $region5: #{tpu_custom_call.1} parent=1 // pred_fallthru
      _
    // Predicated region
    $region6: #{tpu_custom_call.1} parent=1 // pred_check
      _
    $region7: #{tpu_custom_call.1} parent=1 // pred_check_branch
      %15 = sbr.rel (0) target = $region9
    $region8: #{tpu_custom_call.1} parent=1 // pred_region
      _
    $region9: #{tpu_custom_call.1} parent=1 // pred_fallthru
      _
    // Predicated region
    $region10: #{tpu_custom_call.1} parent=1 // pred_check
      _
    $region11: #{tpu_custom_call.1} parent=1 // pred_check_branch
      %17 = sbr.rel (0) target = $region13
    $region12: #{tpu_custom_call.1} parent=1 // pred_region
      _
    $region13: #{tpu_custom_call.1} parent=1 // pred_fallthru
      _
    // Predicated region
    $region14: #{tpu_custom_call.1} parent=1 // pred_check
      _
    $region15: #{tpu_custom_call.1} parent=1 // pred_check_branch
      %19 = sbr.rel (0) target = $region17
    $region16: #{tpu_custom_call.1} parent=1 // pred_region
      _
    $region17: #{tpu_custom_call.1} parent=1 // pred_fallthru
      _
    // Predicated region
    $region18: #{tpu_custom_call.1} parent=1 // pred_check
      _
    $region19: #{tpu_custom_call.1} parent=1 // pred_check_branch
      %21 = sbr.rel (0) target = $region21
    $region20: #{tpu_custom_call.1} parent=1 // pred_region
      _
    $region21: #{tpu_custom_call.1} parent=1 // pred_fallthru
      _
    // Predicated region
    $region22: #{tpu_custom_call.1} parent=1 // pred_check
      _
    $region23: #{tpu_custom_call.1} parent=1 // pred_check_branch
      %23 = sbr.rel (0) target = $region25
    $region24: #{tpu_custom_call.1} parent=1 // pred_region
      _
    $region25: #{tpu_custom_call.1} parent=1 // pred_fallthru
      _
    %v24 = vld [vmem:[%s0] sm:$0xff]
    %v25 = vld [vmem:[%s0 + $0x8] sm:$0xff]
    %v26 = vld [vmem:[%s0 + $0x10] sm:$0xff]
    %v27 = vld [vmem:[%s0 + $0x18] sm:$0xff]
    %v28 = vld [vmem:[%s0 + $0x20] sm:$0xff]
    %v29 = vld [vmem:[%s0 + $0x28] sm:$0xff]
    %v30 = vld [vmem:[%s0 + $0x30] sm:$0xff]
    %v31 = vld [vmem:[%s0 + $0x38] sm:$0xff]
    %v32 = vld [vmem:[%s1] sm:$0xff]
    %v33 = vld [vmem:[%s1 + $0x8] sm:$0xff]
    %v34 = vld [vmem:[%s1 + $0x10] sm:$0xff]
    %v35 = vld [vmem:[%s1 + $0x18] sm:$0xff]
    %v36 = vld [vmem:[%s1 + $0x20] sm:$0xff]
    %v37 = vld [vmem:[%s1 + $0x28] sm:$0xff]
    %v38 = vld [vmem:[%s1 + $0x30] sm:$0xff]
    %v39 = vld [vmem:[%s1 + $0x38] sm:$0xff]
    %v40 = vld [vmem:[%s2] sm:$0xff]
    %v41 = vld [vmem:[%s2 + $0x8] sm:$0xff]
    %v42 = vld [vmem:[%s2 + $0x10] sm:$0xff]
    %v43 = vld [vmem:[%s2 + $0x18] sm:$0xff]
    %v44 = vld [vmem:[%s2 + $0x20] sm:$0xff]
    %v45 = vld [vmem:[%s2 + $0x28] sm:$0xff]
    %v46 = vld [vmem:[%s2 + $0x30] sm:$0xff]
    %v47 = vld [vmem:[%s2 + $0x38] sm:$0xff]
    %v48 = vld [vmem:[%s2 + $0x40] sm:$0xff]
    %v49 = vld [vmem:[%s2 + $0x48] sm:$0xff]
    %v50 = vld [vmem:[%s2 + $0x50] sm:$0xff]
    %v51 = vld [vmem:[%s2 + $0x58] sm:$0xff]
    %v52 = vld [vmem:[%s2 + $0x60] sm:$0xff]
    %v53 = vld [vmem:[%s2 + $0x68] sm:$0xff]
    %v54 = vld [vmem:[%s2 + $0x70] sm:$0xff]
    %v55 = vld [vmem:[%s2 + $0x78] sm:$0xff]
    %v56 = vld [vmem:[%s2 + $0x80] sm:$0xff]
    %v57 = vld [vmem:[%s2 + $0x88] sm:$0xff]
    %v58 = vld [vmem:[%s2 + $0x90] sm:$0xff]
    %v59 = vld [vmem:[%s2 + $0x98] sm:$0xff]
    %v60 = vld [vmem:[%s2 + $0xa0] sm:$0xff]
    %v61 = vld [vmem:[%s2 + $0xa8] sm:$0xff]
    %v62 = vld [vmem:[%s2 + $0xb0] sm:$0xff]
    %v63 = vld [vmem:[%s2 + $0xb8] sm:$0xff]
    %v64 = vld [vmem:[%s2 + $0xc0] sm:$0xff]
    %v65 = vld [vmem:[%s2 + $0xc8] sm:$0xff]
    %v66 = vld [vmem:[%s2 + $0xd0] sm:$0xff]
    %v67 = vld [vmem:[%s2 + $0xd8] sm:$0xff]
    %v68 = vld [vmem:[%s2 + $0xe0] sm:$0xff]
    %v69 = vld [vmem:[%s2 + $0xe8] sm:$0xff]
    %v70 = vld [vmem:[%s2 + $0xf0] sm:$0xff]
    %v71 = vld [vmem:[%s2 + $0xf8] sm:$0xff]
    %v72 = vld [vmem:[%s3] sm:$0x1]
    %v73 = vld [vmem:[%s3 + $0x1] sm:$0x1]
    %v74 = vld [vmem:[%s3 + $0x2] sm:$0x1]
    %v75 = vld [vmem:[%s3 + $0x3] sm:$0x1]
    %v76 = vld [vmem:[%s3 + $0x4] sm:$0x1]
    %v77 = vld [vmem:[%s3 + $0x5] sm:$0x1]
    %v78 = vld [vmem:[%s3 + $0x6] sm:$0x1]
    %v79 = vld [vmem:[%s3 + $0x7] sm:$0x1]
    %v88 = vlaneseq
    %v89 = vshrl.u32 %v88, 7
    %v90 = vsub.s32 0, %v89
    %v91 = vrot.slane %v72, %v90
    %v92 = vlaneseq
    %v93 = vshrl.u32 %v92, 7
    %v94 = vsub.s32 0, %v93
    %v95 = vrot.slane %v73, %v94
    %v96 = vlaneseq
    %v97 = vshrl.u32 %v96, 7
    %v98 = vsub.s32 0, %v97
    %v99 = vrot.slane %v74, %v98
    %v100 = vlaneseq
    %v101 = vshrl.u32 %v100, 7
    %v102 = vsub.s32 0, %v101
    %v103 = vrot.slane %v75, %v102
    %v104 = vlaneseq
    %v105 = vshrl.u32 %v104, 7
    %v106 = vsub.s32 0, %v105
    %v107 = vrot.slane %v76, %v106
    %v108 = vlaneseq
    %v109 = vshrl.u32 %v108, 7
    %v110 = vsub.s32 0, %v109
    %v111 = vrot.slane %v77, %v110
    %v112 = vlaneseq
    %v113 = vshrl.u32 %v112, 7
    %v114 = vsub.s32 0, %v113
    %v115 = vrot.slane %v78, %v114
    %v116 = vlaneseq
    %v117 = vshrl.u32 %v116, 7
    %v118 = vsub.s32 0, %v117
    %v119 = vrot.slane %v79, %v118
    %vm128 = vcmask 261120
    %v130 = vsel %vm128, %v24, 0
    %132 = vmatprep.subr.mxu0 0.0
    %133 = vmatpush1.msra.mxu0 %v40
    %134 = vmatprep.subr.mxu0 0.0
    %135 = vmatpush1.msra.mxu0 %v41
    %136 = vmatprep.subr.mxu0 0.0
    %137 = vmatpush1.msra.mxu0 %v42
    %138 = vmatprep.subr.mxu0 0.0
    %139 = vmatpush1.msra.mxu0 %v43
    %140 = vmatprep.subr.mxu0 0.0
    %141 = vmatpush1.msra.mxu0 0.0
    %142 = vmatprep.subr.mxu0 0.0
    %143 = vmatpush1.msra.mxu0 0.0
    %144 = vmatprep.subr.mxu0 0.0
    %145 = vmatpush1.msra.mxu0 0.0
    %146 = vmatprep.subr.mxu0 0.0
    %147 = vmatpush1.msra.mxu0 0.0
    %148 = vmatprep.subr.mxu0 0.0
    %149 = vmatpush1.msra.mxu0 0.0
    %150 = vmatprep.subr.mxu0 0.0
    %151 = vmatpush1.msra.mxu0 0.0
    %152 = vmatprep.subr.mxu0 0.0
    %153 = vmatpush1.msra.mxu0 0.0
    %154 = vmatprep.subr.mxu0 0.0
    %155 = vmatpush1.msra.mxu0 0.0
    %156 = vmatprep.subr.mxu0 0.0
    %157 = vmatpush1.msra.mxu0 0.0
    %158 = vmatprep.subr.mxu0 0.0
    %159 = vmatpush1.msra.mxu0 0.0
    %160 = vmatprep.subr.mxu0 0.0
    %161 = vmatpush1.msra.mxu0 0.0
    %162 = vmatprep.subr.mxu0 0.0
    %163 = vmatpush1.msra.mxu0 0.0
    %164 = vmatprep.subr.mxu0 0.0
    %165 = vmatpush1.msra.mxu0 0.0
    %166 = vmatprep.subr.mxu0 0.0
    %167 = vmatpush1.msra.mxu0 0.0
    %168 = vmatprep.subr.mxu0 0.0
    %169 = vmatpush1.msra.mxu0 0.0
    %170 = vmatprep.subr.mxu0 0.0
    %171 = vmatpush1.msra.mxu0 0.0
    %172 = vmatprep.subr.mxu0 0.0
    %173 = vmatpush1.msra.mxu0 0.0
    %174 = vmatprep.subr.mxu0 0.0
    %175 = vmatpush1.msra.mxu0 0.0
    %176 = vmatprep.subr.mxu0 0.0
    %177 = vmatpush1.msra.mxu0 0.0
    %178 = vmatprep.subr.mxu0 0.0
    %179 = vmatpush1.msra.mxu0 0.0
    %180 = vmatprep.subr.mxu0 0.0
    %181 = vmatpush1.msra.mxu0 0.0
    %182 = vmatprep.subr.mxu0 0.0
    %183 = vmatpush1.msra.mxu0 0.0
    %184 = vmatprep.subr.mxu0 0.0
    %185 = vmatpush1.msra.mxu0 0.0
    %186 = vmatprep.subr.mxu0 0.0
    %187 = vmatpush1.msra.mxu0 0.0
    %188 = vmatprep.subr.mxu0 0.0
    %189 = vmatpush1.msra.mxu0 0.0
    %190 = vmatprep.subr.mxu0 0.0
    %191 = vmatpush1.msra.mxu0 0.0
    %192 = vmatprep.subr.mxu0 0.0
    %193 = vmatpush1.msra.mxu0 0.0
    %194 = vmatprep.subr.mxu0 0.0
    %195 = vmatpush1.msra.mxu0 0.0
    %196 = vmatprep.mubr.f32.mxu0 0.0
    %197 = vmatmul.mubr.f32.gmra.mrb[0].mxu0 %v130
    %v198 = vpop.f32.mrb[0].mxu0
    %v199 = vadd.f32 %v91, %v198
    %v200 = vpop.f32.mrb[0].mxu0
    %201 = vdwg.mxu0
    %v203 = vsel %vm128, %v25, 0
    %205 = vmatprep.subr.mxu0 0.0
    %206 = vmatpush1.msra.mxu0 %v44
    %207 = vmatprep.subr.mxu0 0.0
    %208 = vmatpush1.msra.mxu0 %v45
    %209 = vmatprep.subr.mxu0 0.0
    %210 = vmatpush1.msra.mxu0 %v46
    %211 = vmatprep.subr.mxu0 0.0
    %212 = vmatpush1.msra.mxu0 %v47
    %213 = vmatprep.subr.mxu0 0.0
    %214 = vmatpush1.msra.mxu0 0.0
    %215 = vmatprep.subr.mxu0 0.0
    %216 = vmatpush1.msra.mxu0 0.0
    %217 = vmatprep.subr.mxu0 0.0
    %218 = vmatpush1.msra.mxu0 0.0
    %219 = vmatprep.subr.mxu0 0.0
    %220 = vmatpush1.msra.mxu0 0.0
    %221 = vmatprep.subr.mxu0 0.0
    %222 = vmatpush1.msra.mxu0 0.0
    %223 = vmatprep.subr.mxu0 0.0
    %224 = vmatpush1.msra.mxu0 0.0
    %225 = vmatprep.subr.mxu0 0.0
    %226 = vmatpush1.msra.mxu0 0.0
    %227 = vmatprep.subr.mxu0 0.0
    %228 = vmatpush1.msra.mxu0 0.0
    %229 = vmatprep.subr.mxu0 0.0
    %230 = vmatpush1.msra.mxu0 0.0
    %231 = vmatprep.subr.mxu0 0.0
    %232 = vmatpush1.msra.mxu0 0.0
    %233 = vmatprep.subr.mxu0 0.0
    %234 = vmatpush1.msra.mxu0 0.0
    %235 = vmatprep.subr.mxu0 0.0
    %236 = vmatpush1.msra.mxu0 0.0
    %237 = vmatprep.subr.mxu0 0.0
    %238 = vmatpush1.msra.mxu0 0.0
    %239 = vmatprep.subr.mxu0 0.0
    %240 = vmatpush1.msra.mxu0 0.0
    %241 = vmatprep.subr.mxu0 0.0
    %242 = vmatpush1.msra.mxu0 0.0
    %243 = vmatprep.subr.mxu0 0.0
    %244 = vmatpush1.msra.mxu0 0.0
    %245 = vmatprep.subr.mxu0 0.0
    %246 = vmatpush1.msra.mxu0 0.0
    %247 = vmatprep.subr.mxu0 0.0
    %248 = vmatpush1.msra.mxu0 0.0
    %249 = vmatprep.subr.mxu0 0.0
    %250 = vmatpush1.msra.mxu0 0.0
    %251 = vmatprep.subr.mxu0 0.0
    %252 = vmatpush1.msra.mxu0 0.0
    %253 = vmatprep.subr.mxu0 0.0
    %254 = vmatpush1.msra.mxu0 0.0
    %255 = vmatprep.subr.mxu0 0.0
    %256 = vmatpush1.msra.mxu0 0.0
    %257 = vmatprep.subr.mxu0 0.0
    %258 = vmatpush1.msra.mxu0 0.0
    %259 = vmatprep.subr.mxu0 0.0
    %260 = vmatpush1.msra.mxu0 0.0
    %261 = vmatprep.subr.mxu0 0.0
    %262 = vmatpush1.msra.mxu0 0.0
    %263 = vmatprep.subr.mxu0 0.0
    %264 = vmatpush1.msra.mxu0 0.0
    %265 = vmatprep.subr.mxu0 0.0
    %266 = vmatpush1.msra.mxu0 0.0
    %267 = vmatprep.subr.mxu0 0.0
    %268 = vmatpush1.msra.mxu0 0.0
    %269 = vmatprep.mubr.f32.mxu0 0.0
    %270 = vmatmul.mubr.f32.gmra.mrb[0].mxu0 %v203
    %v271 = vpop.f32.mrb[0].mxu0
    %v272 = vadd.f32 %v95, %v271
    %v273 = vpop.f32.mrb[0].mxu0
    %274 = vdwg.mxu0
    %v276 = vsel %vm128, %v26, 0
    %278 = vmatprep.subr.mxu0 0.0
    %279 = vmatpush1.msra.mxu0 %v48
    %280 = vmatprep.subr.mxu0 0.0
    %281 = vmatpush1.msra.mxu0 %v49
    %282 = vmatprep.subr.mxu0 0.0
    %283 = vmatpush1.msra.mxu0 %v50
    %284 = vmatprep.subr.mxu0 0.0
    %285 = vmatpush1.msra.mxu0 %v51
    %286 = vmatprep.subr.mxu0 0.0
    %287 = vmatpush1.msra.mxu0 0.0
    %288 = vmatprep.subr.mxu0 0.0
    %289 = vmatpush1.msra.mxu0 0.0
    %290 = vmatprep.subr.mxu0 0.0
    %291 = vmatpush1.msra.mxu0 0.0
    %292 = vmatprep.subr.mxu0 0.0
    %293 = vmatpush1.msra.mxu0 0.0
    %294 = vmatprep.subr.mxu0 0.0
    %295 = vmatpush1.msra.mxu0 0.0
    %296 = vmatprep.subr.mxu0 0.0
    %297 = vmatpush1.msra.mxu0 0.0
    %298 = vmatprep.subr.mxu0 0.0
    %299 = vmatpush1.msra.mxu0 0.0
    %300 = vmatprep.subr.mxu0 0.0
    %301 = vmatpush1.msra.mxu0 0.0
    %302 = vmatprep.subr.mxu0 0.0
    %303 = vmatpush1.msra.mxu0 0.0
    %304 = vmatprep.subr.mxu0 0.0
    %305 = vmatpush1.msra.mxu0 0.0
    %306 = vmatprep.subr.mxu0 0.0
    %307 = vmatpush1.msra.mxu0 0.0
    %308 = vmatprep.subr.mxu0 0.0
    %309 = vmatpush1.msra.mxu0 0.0
    %310 = vmatprep.subr.mxu0 0.0
    %311 = vmatpush1.msra.mxu0 0.0
    %312 = vmatprep.subr.mxu0 0.0
    %313 = vmatpush1.msra.mxu0 0.0
    %314 = vmatprep.subr.mxu0 0.0
    %315 = vmatpush1.msra.mxu0 0.0
    %316 = vmatprep.subr.mxu0 0.0
    %317 = vmatpush1.msra.mxu0 0.0
    %318 = vmatprep.subr.mxu0 0.0
    %319 = vmatpush1.msra.mxu0 0.0
    %320 = vmatprep.subr.mxu0 0.0
    %321 = vmatpush1.msra.mxu0 0.0
    %322 = vmatprep.subr.mxu0 0.0
    %323 = vmatpush1.msra.mxu0 0.0
    %324 = vmatprep.subr.mxu0 0.0
    %325 = vmatpush1.msra.mxu0 0.0
    %326 = vmatprep.subr.mxu0 0.0
    %327 = vmatpush1.msra.mxu0 0.0
    %328 = vmatprep.subr.mxu0 0.0
    %329 = vmatpush1.msra.mxu0 0.0
    %330 = vmatprep.subr.mxu0 0.0
    %331 = vmatpush1.msra.mxu0 0.0
    %332 = vmatprep.subr.mxu0 0.0
    %333 = vmatpush1.msra.mxu0 0.0
    %334 = vmatprep.subr.mxu0 0.0
    %335 = vmatpush1.msra.mxu0 0.0
    %336 = vmatprep.subr.mxu0 0.0
    %337 = vmatpush1.msra.mxu0 0.0
    %338 = vmatprep.subr.mxu0 0.0
    %339 = vmatpush1.msra.mxu0 0.0
    %340 = vmatprep.subr.mxu0 0.0
    %341 = vmatpush1.msra.mxu0 0.0
    %342 = vmatprep.mubr.f32.mxu0 0.0
    %343 = vmatmul.mubr.f32.gmra.mrb[0].mxu0 %v276
    %v344 = vpop.f32.mrb[0].mxu0
    %v345 = vadd.f32 %v99, %v344
    %v346 = vpop.f32.mrb[0].mxu0
    %347 = vdwg.mxu0
    %v349 = vsel %vm128, %v27, 0
    %351 = vmatprep.subr.mxu0 0.0
    %352 = vmatpush1.msra.mxu0 %v52
    %353 = vmatprep.subr.mxu0 0.0
    %354 = vmatpush1.msra.mxu0 %v53
    %355 = vmatprep.subr.mxu0 0.0
    %356 = vmatpush1.msra.mxu0 %v54
    %357 = vmatprep.subr.mxu0 0.0
    %358 = vmatpush1.msra.mxu0 %v55
    %359 = vmatprep.subr.mxu0 0.0
    %360 = vmatpush1.msra.mxu0 0.0
    %361 = vmatprep.subr.mxu0 0.0
    %362 = vmatpush1.msra.mxu0 0.0
    %363 = vmatprep.subr.mxu0 0.0
    %364 = vmatpush1.msra.mxu0 0.0
    %365 = vmatprep.subr.mxu0 0.0
    %366 = vmatpush1.msra.mxu0 0.0
    %367 = vmatprep.subr.mxu0 0.0
    %368 = vmatpush1.msra.mxu0 0.0
    %369 = vmatprep.subr.mxu0 0.0
    %370 = vmatpush1.msra.mxu0 0.0
    %371 = vmatprep.subr.mxu0 0.0
    %372 = vmatpush1.msra.mxu0 0.0
    %373 = vmatprep.subr.mxu0 0.0
    %374 = vmatpush1.msra.mxu0 0.0
    %375 = vmatprep.subr.mxu0 0.0
    %376 = vmatpush1.msra.mxu0 0.0
    %377 = vmatprep.subr.mxu0 0.0
    %378 = vmatpush1.msra.mxu0 0.0
    %379 = vmatprep.subr.mxu0 0.0
    %380 = vmatpush1.msra.mxu0 0.0
    %381 = vmatprep.subr.mxu0 0.0
    %382 = vmatpush1.msra.mxu0 0.0
    %383 = vmatprep.subr.mxu0 0.0
    %384 = vmatpush1.msra.mxu0 0.0
    %385 = vmatprep.subr.mxu0 0.0
    %386 = vmatpush1.msra.mxu0 0.0
    %387 = vmatprep.subr.mxu0 0.0
    %388 = vmatpush1.msra.mxu0 0.0
    %389 = vmatprep.subr.mxu0 0.0
    %390 = vmatpush1.msra.mxu0 0.0
    %391 = vmatprep.subr.mxu0 0.0
    %392 = vmatpush1.msra.mxu0 0.0
    %393 = vmatprep.subr.mxu0 0.0
    %394 = vmatpush1.msra.mxu0 0.0
    %395 = vmatprep.subr.mxu0 0.0
    %396 = vmatpush1.msra.mxu0 0.0
    %397 = vmatprep.subr.mxu0 0.0
    %398 = vmatpush1.msra.mxu0 0.0
    %399 = vmatprep.subr.mxu0 0.0
    %400 = vmatpush1.msra.mxu0 0.0
    %401 = vmatprep.subr.mxu0 0.0
    %402 = vmatpush1.msra.mxu0 0.0
    %403 = vmatprep.subr.mxu0 0.0
    %404 = vmatpush1.msra.mxu0 0.0
    %405 = vmatprep.subr.mxu0 0.0
    %406 = vmatpush1.msra.mxu0 0.0
    %407 = vmatprep.subr.mxu0 0.0
    %408 = vmatpush1.msra.mxu0 0.0
    %409 = vmatprep.subr.mxu0 0.0
    %410 = vmatpush1.msra.mxu0 0.0
    %411 = vmatprep.subr.mxu0 0.0
    %412 = vmatpush1.msra.mxu0 0.0
    %413 = vmatprep.subr.mxu0 0.0
    %414 = vmatpush1.msra.mxu0 0.0
    %415 = vmatprep.mubr.f32.mxu0 0.0
    %416 = vmatmul.mubr.f32.gmra.mrb[0].mxu0 %v349
    %v417 = vpop.f32.mrb[0].mxu0
    %v418 = vadd.f32 %v103, %v417
    %v419 = vpop.f32.mrb[0].mxu0
    %420 = vdwg.mxu0
    %v422 = vsel %vm128, %v28, 0
    %424 = vmatprep.subr.mxu0 0.0
    %425 = vmatpush1.msra.mxu0 %v56
    %426 = vmatprep.subr.mxu0 0.0
    %427 = vmatpush1.msra.mxu0 %v57
    %428 = vmatprep.subr.mxu0 0.0
    %429 = vmatpush1.msra.mxu0 %v58
    %430 = vmatprep.subr.mxu0 0.0
    %431 = vmatpush1.msra.mxu0 %v59
    %432 = vmatprep.subr.mxu0 0.0
    %433 = vmatpush1.msra.mxu0 0.0
    %434 = vmatprep.subr.mxu0 0.0
    %435 = vmatpush1.msra.mxu0 0.0
    %436 = vmatprep.subr.mxu0 0.0
    %437 = vmatpush1.msra.mxu0 0.0
    %438 = vmatprep.subr.mxu0 0.0
    %439 = vmatpush1.msra.mxu0 0.0
    %440 = vmatprep.subr.mxu0 0.0
    %441 = vmatpush1.msra.mxu0 0.0
    %442 = vmatprep.subr.mxu0 0.0
    %443 = vmatpush1.msra.mxu0 0.0
    %444 = vmatprep.subr.mxu0 0.0
    %445 = vmatpush1.msra.mxu0 0.0
    %446 = vmatprep.subr.mxu0 0.0
    %447 = vmatpush1.msra.mxu0 0.0
    %448 = vmatprep.subr.mxu0 0.0
    %449 = vmatpush1.msra.mxu0 0.0
    %450 = vmatprep.subr.mxu0 0.0
    %451 = vmatpush1.msra.mxu0 0.0
    %452 = vmatprep.subr.mxu0 0.0
    %453 = vmatpush1.msra.mxu0 0.0
    %454 = vmatprep.subr.mxu0 0.0
    %455 = vmatpush1.msra.mxu0 0.0
    %456 = vmatprep.subr.mxu0 0.0
    %457 = vmatpush1.msra.mxu0 0.0
    %458 = vmatprep.subr.mxu0 0.0
    %459 = vmatpush1.msra.mxu0 0.0
    %460 = vmatprep.subr.mxu0 0.0
    %461 = vmatpush1.msra.mxu0 0.0
    %462 = vmatprep.subr.mxu0 0.0
    %463 = vmatpush1.msra.mxu0 0.0
    %464 = vmatprep.subr.mxu0 0.0
    %465 = vmatpush1.msra.mxu0 0.0
    %466 = vmatprep.subr.mxu0 0.0
    %467 = vmatpush1.msra.mxu0 0.0
    %468 = vmatprep.subr.mxu0 0.0
    %469 = vmatpush1.msra.mxu0 0.0
    %470 = vmatprep.subr.mxu0 0.0
    %471 = vmatpush1.msra.mxu0 0.0
    %472 = vmatprep.subr.mxu0 0.0
    %473 = vmatpush1.msra.mxu0 0.0
    %474 = vmatprep.subr.mxu0 0.0
    %475 = vmatpush1.msra.mxu0 0.0
    %476 = vmatprep.subr.mxu0 0.0
    %477 = vmatpush1.msra.mxu0 0.0
    %478 = vmatprep.subr.mxu0 0.0
    %479 = vmatpush1.msra.mxu0 0.0
    %480 = vmatprep.subr.mxu0 0.0
    %481 = vmatpush1.msra.mxu0 0.0
    %482 = vmatprep.subr.mxu0 0.0
    %483 = vmatpush1.msra.mxu0 0.0
    %484 = vmatprep.subr.mxu0 0.0
    %485 = vmatpush1.msra.mxu0 0.0
    %486 = vmatprep.subr.mxu0 0.0
    %487 = vmatpush1.msra.mxu0 0.0
    %488 = vmatprep.mubr.f32.mxu0 0.0
    %489 = vmatmul.mubr.f32.gmra.mrb[0].mxu0 %v422
    %v490 = vpop.f32.mrb[0].mxu0
    %v491 = vadd.f32 %v107, %v490
    %v492 = vpop.f32.mrb[0].mxu0
    %493 = vdwg.mxu0
    %v495 = vsel %vm128, %v29, 0
    %497 = vmatprep.subr.mxu0 0.0
    %498 = vmatpush1.msra.mxu0 %v60
    %499 = vmatprep.subr.mxu0 0.0
    %500 = vmatpush1.msra.mxu0 %v61
    %501 = vmatprep.subr.mxu0 0.0
    %502 = vmatpush1.msra.mxu0 %v62
    %503 = vmatprep.subr.mxu0 0.0
    %504 = vmatpush1.msra.mxu0 %v63
    %505 = vmatprep.subr.mxu0 0.0
    %506 = vmatpush1.msra.mxu0 0.0
    %507 = vmatprep.subr.mxu0 0.0
    %508 = vmatpush1.msra.mxu0 0.0
    %509 = vmatprep.subr.mxu0 0.0
    %510 = vmatpush1.msra.mxu0 0.0
    %511 = vmatprep.subr.mxu0 0.0
    %512 = vmatpush1.msra.mxu0 0.0
    %513 = vmatprep.subr.mxu0 0.0
    %514 = vmatpush1.msra.mxu0 0.0
    %515 = vmatprep.subr.mxu0 0.0
    %516 = vmatpush1.msra.mxu0 0.0
    %517 = vmatprep.subr.mxu0 0.0
    %518 = vmatpush1.msra.mxu0 0.0
    %519 = vmatprep.subr.mxu0 0.0
    %520 = vmatpush1.msra.mxu0 0.0
    %521 = vmatprep.subr.mxu0 0.0
    %522 = vmatpush1.msra.mxu0 0.0
    %523 = vmatprep.subr.mxu0 0.0
    %524 = vmatpush1.msra.mxu0 0.0
    %525 = vmatprep.subr.mxu0 0.0
    %526 = vmatpush1.msra.mxu0 0.0
    %527 = vmatprep.subr.mxu0 0.0
    %528 = vmatpush1.msra.mxu0 0.0
    %529 = vmatprep.subr.mxu0 0.0
    %530 = vmatpush1.msra.mxu0 0.0
    %531 = vmatprep.subr.mxu0 0.0
    %532 = vmatpush1.msra.mxu0 0.0
    %533 = vmatprep.subr.mxu0 0.0
    %534 = vmatpush1.msra.mxu0 0.0
    %535 = vmatprep.subr.mxu0 0.0
    %536 = vmatpush1.msra.mxu0 0.0
    %537 = vmatprep.subr.mxu0 0.0
    %538 = vmatpush1.msra.mxu0 0.0
    %539 = vmatprep.subr.mxu0 0.0
    %540 = vmatpush1.msra.mxu0 0.0
    %541 = vmatprep.subr.mxu0 0.0
    %542 = vmatpush1.msra.mxu0 0.0
    %543 = vmatprep.subr.mxu0 0.0
    %544 = vmatpush1.msra.mxu0 0.0
    %545 = vmatprep.subr.mxu0 0.0
    %546 = vmatpush1.msra.mxu0 0.0
    %547 = vmatprep.subr.mxu0 0.0
    %548 = vmatpush1.msra.mxu0 0.0
    %549 = vmatprep.subr.mxu0 0.0
    %550 = vmatpush1.msra.mxu0 0.0
    %551 = vmatprep.subr.mxu0 0.0
    %552 = vmatpush1.msra.mxu0 0.0
    %553 = vmatprep.subr.mxu0 0.0
    %554 = vmatpush1.msra.mxu0 0.0
    %555 = vmatprep.subr.mxu0 0.0
    %556 = vmatpush1.msra.mxu0 0.0
    %557 = vmatprep.subr.mxu0 0.0
    %558 = vmatpush1.msra.mxu0 0.0
    %559 = vmatprep.subr.mxu0 0.0
    %560 = vmatpush1.msra.mxu0 0.0
    %561 = vmatprep.mubr.f32.mxu0 0.0
    %562 = vmatmul.mubr.f32.gmra.mrb[0].mxu0 %v495
    %v563 = vpop.f32.mrb[0].mxu0
    %v564 = vadd.f32 %v111, %v563
    %v565 = vpop.f32.mrb[0].mxu0
    %566 = vdwg.mxu0
    %v568 = vsel %vm128, %v30, 0
    %570 = vmatprep.subr.mxu0 0.0
    %571 = vmatpush1.msra.mxu0 %v64
    %572 = vmatprep.subr.mxu0 0.0
    %573 = vmatpush1.msra.mxu0 %v65
    %574 = vmatprep.subr.mxu0 0.0
    %575 = vmatpush1.msra.mxu0 %v66
    %576 = vmatprep.subr.mxu0 0.0
    %577 = vmatpush1.msra.mxu0 %v67
    %578 = vmatprep.subr.mxu0 0.0
    %579 = vmatpush1.msra.mxu0 0.0
    %580 = vmatprep.subr.mxu0 0.0
    %581 = vmatpush1.msra.mxu0 0.0
    %582 = vmatprep.subr.mxu0 0.0
    %583 = vmatpush1.msra.mxu0 0.0
    %584 = vmatprep.subr.mxu0 0.0
    %585 = vmatpush1.msra.mxu0 0.0
    %586 = vmatprep.subr.mxu0 0.0
    %587 = vmatpush1.msra.mxu0 0.0
    %588 = vmatprep.subr.mxu0 0.0
    %589 = vmatpush1.msra.mxu0 0.0
    %590 = vmatprep.subr.mxu0 0.0
    %591 = vmatpush1.msra.mxu0 0.0
    %592 = vmatprep.subr.mxu0 0.0
    %593 = vmatpush1.msra.mxu0 0.0
    %594 = vmatprep.subr.mxu0 0.0
    %595 = vmatpush1.msra.mxu0 0.0
    %596 = vmatprep.subr.mxu0 0.0
    %597 = vmatpush1.msra.mxu0 0.0
    %598 = vmatprep.subr.mxu0 0.0
    %599 = vmatpush1.msra.mxu0 0.0
    %600 = vmatprep.subr.mxu0 0.0
    %601 = vmatpush1.msra.mxu0 0.0
    %602 = vmatprep.subr.mxu0 0.0
    %603 = vmatpush1.msra.mxu0 0.0
    %604 = vmatprep.subr.mxu0 0.0
    %605 = vmatpush1.msra.mxu0 0.0
    %606 = vmatprep.subr.mxu0 0.0
    %607 = vmatpush1.msra.mxu0 0.0
    %608 = vmatprep.subr.mxu0 0.0
    %609 = vmatpush1.msra.mxu0 0.0
    %610 = vmatprep.subr.mxu0 0.0
    %611 = vmatpush1.msra.mxu0 0.0
    %612 = vmatprep.subr.mxu0 0.0
    %613 = vmatpush1.msra.mxu0 0.0
    %614 = vmatprep.subr.mxu0 0.0
    %615 = vmatpush1.msra.mxu0 0.0
    %616 = vmatprep.subr.mxu0 0.0
    %617 = vmatpush1.msra.mxu0 0.0
    %618 = vmatprep.subr.mxu0 0.0
    %619 = vmatpush1.msra.mxu0 0.0
    %620 = vmatprep.subr.mxu0 0.0
    %621 = vmatpush1.msra.mxu0 0.0
    %622 = vmatprep.subr.mxu0 0.0
    %623 = vmatpush1.msra.mxu0 0.0
    %624 = vmatprep.subr.mxu0 0.0
    %625 = vmatpush1.msra.mxu0 0.0
    %626 = vmatprep.subr.mxu0 0.0
    %627 = vmatpush1.msra.mxu0 0.0
    %628 = vmatprep.subr.mxu0 0.0
    %629 = vmatpush1.msra.mxu0 0.0
    %630 = vmatprep.subr.mxu0 0.0
    %631 = vmatpush1.msra.mxu0 0.0
    %632 = vmatprep.subr.mxu0 0.0
    %633 = vmatpush1.msra.mxu0 0.0
    %634 = vmatprep.mubr.f32.mxu0 0.0
    %635 = vmatmul.mubr.f32.gmra.mrb[0].mxu0 %v568
    %v636 = vpop.f32.mrb[0].mxu0
    %v637 = vadd.f32 %v115, %v636
    %v638 = vpop.f32.mrb[0].mxu0
    %639 = vdwg.mxu0
    %v641 = vsel %vm128, %v31, 0
    %643 = vmatprep.subr.mxu0 0.0
    %644 = vmatpush1.msra.mxu0 %v68
    %645 = vmatprep.subr.mxu0 0.0
    %646 = vmatpush1.msra.mxu0 %v69
    %647 = vmatprep.subr.mxu0 0.0
    %648 = vmatpush1.msra.mxu0 %v70
    %649 = vmatprep.subr.mxu0 0.0
    %650 = vmatpush1.msra.mxu0 %v71
    %651 = vmatprep.subr.mxu0 0.0
    %652 = vmatpush1.msra.mxu0 0.0
    %653 = vmatprep.subr.mxu0 0.0
    %654 = vmatpush1.msra.mxu0 0.0
    %655 = vmatprep.subr.mxu0 0.0
    %656 = vmatpush1.msra.mxu0 0.0
    %657 = vmatprep.subr.mxu0 0.0
    %658 = vmatpush1.msra.mxu0 0.0
    %659 = vmatprep.subr.mxu0 0.0
    %660 = vmatpush1.msra.mxu0 0.0
    %661 = vmatprep.subr.mxu0 0.0
    %662 = vmatpush1.msra.mxu0 0.0
    %663 = vmatprep.subr.mxu0 0.0
    %664 = vmatpush1.msra.mxu0 0.0
    %665 = vmatprep.subr.mxu0 0.0
    %666 = vmatpush1.msra.mxu0 0.0
    %667 = vmatprep.subr.mxu0 0.0
    %668 = vmatpush1.msra.mxu0 0.0
    %669 = vmatprep.subr.mxu0 0.0
    %670 = vmatpush1.msra.mxu0 0.0
    %671 = vmatprep.subr.mxu0 0.0
    %672 = vmatpush1.msra.mxu0 0.0
    %673 = vmatprep.subr.mxu0 0.0
    %674 = vmatpush1.msra.mxu0 0.0
    %675 = vmatprep.subr.mxu0 0.0
    %676 = vmatpush1.msra.mxu0 0.0
    %677 = vmatprep.subr.mxu0 0.0
    %678 = vmatpush1.msra.mxu0 0.0
    %679 = vmatprep.subr.mxu0 0.0
    %680 = vmatpush1.msra.mxu0 0.0
    %681 = vmatprep.subr.mxu0 0.0
    %682 = vmatpush1.msra.mxu0 0.0
    %683 = vmatprep.subr.mxu0 0.0
    %684 = vmatpush1.msra.mxu0 0.0
    %685 = vmatprep.subr.mxu0 0.0
    %686 = vmatpush1.msra.mxu0 0.0
    %687 = vmatprep.subr.mxu0 0.0
    %688 = vmatpush1.msra.mxu0 0.0
    %689 = vmatprep.subr.mxu0 0.0
    %690 = vmatpush1.msra.mxu0 0.0
    %691 = vmatprep.subr.mxu0 0.0
    %692 = vmatpush1.msra.mxu0 0.0
    %693 = vmatprep.subr.mxu0 0.0
    %694 = vmatpush1.msra.mxu0 0.0
    %695 = vmatprep.subr.mxu0 0.0
    %696 = vmatpush1.msra.mxu0 0.0
    %697 = vmatprep.subr.mxu0 0.0
    %698 = vmatpush1.msra.mxu0 0.0
    %699 = vmatprep.subr.mxu0 0.0
    %700 = vmatpush1.msra.mxu0 0.0
    %701 = vmatprep.subr.mxu0 0.0
    %702 = vmatpush1.msra.mxu0 0.0
    %703 = vmatprep.subr.mxu0 0.0
    %704 = vmatpush1.msra.mxu0 0.0
    %705 = vmatprep.subr.mxu0 0.0
    %706 = vmatpush1.msra.mxu0 0.0
    %707 = vmatprep.mubr.f32.mxu0 0.0
    %708 = vmatmul.mubr.f32.gmra.mrb[0].mxu0 %v641
    %v709 = vpop.f32.mrb[0].mxu0
    %v710 = vadd.f32 %v119, %v709
    %v711 = vpop.f32.mrb[0].mxu0
    %712 = vdwg.mxu0
    %v713 = vld [vmem:[%s4] sm:$0xff]
    %v714 = vld [vmem:[%s4 + $0x8] sm:$0xff]
    %v715 = vld [vmem:[%s4 + $0x10] sm:$0xff]
    %v716 = vld [vmem:[%s4 + $0x18] sm:$0xff]
    %v717 = vld [vmem:[%s4 + $0x20] sm:$0xff]
    %v718 = vld [vmem:[%s4 + $0x28] sm:$0xff]
    %v719 = vld [vmem:[%s4 + $0x30] sm:$0xff]
    %v720 = vld [vmem:[%s4 + $0x38] sm:$0xff]
    %v721 = vld [vmem:[%s4 + $0x40] sm:$0xff]
    %v722 = vld [vmem:[%s4 + $0x48] sm:$0xff]
    %v723 = vld [vmem:[%s4 + $0x50] sm:$0xff]
    %v724 = vld [vmem:[%s4 + $0x58] sm:$0xff]
    %v725 = vld [vmem:[%s4 + $0x60] sm:$0xff]
    %v726 = vld [vmem:[%s4 + $0x68] sm:$0xff]
    %v727 = vld [vmem:[%s4 + $0x70] sm:$0xff]
    %v728 = vld [vmem:[%s4 + $0x78] sm:$0xff]
    %v729 = vld [vmem:[%s4 + $0x80] sm:$0xff]
    %v730 = vld [vmem:[%s4 + $0x88] sm:$0xff]
    %v731 = vld [vmem:[%s4 + $0x90] sm:$0xff]
    %v732 = vld [vmem:[%s4 + $0x98] sm:$0xff]
    %v733 = vld [vmem:[%s4 + $0xa0] sm:$0xff]
    %v734 = vld [vmem:[%s4 + $0xa8] sm:$0xff]
    %v735 = vld [vmem:[%s4 + $0xb0] sm:$0xff]
    %v736 = vld [vmem:[%s4 + $0xb8] sm:$0xff]
    %v737 = vld [vmem:[%s4 + $0xc0] sm:$0xff]
    %v738 = vld [vmem:[%s4 + $0xc8] sm:$0xff]
    %v739 = vld [vmem:[%s4 + $0xd0] sm:$0xff]
    %v740 = vld [vmem:[%s4 + $0xd8] sm:$0xff]
    %v741 = vld [vmem:[%s4 + $0xe0] sm:$0xff]
    %v742 = vld [vmem:[%s4 + $0xe8] sm:$0xff]
    %v743 = vld [vmem:[%s4 + $0xf0] sm:$0xff]
    %v744 = vld [vmem:[%s4 + $0xf8] sm:$0xff]
    %v745 = vld [vmem:[%s5] sm:$0x1]
    %v746 = vld [vmem:[%s5 + $0x1] sm:$0x1]
    %v747 = vld [vmem:[%s5 + $0x2] sm:$0x1]
    %v748 = vld [vmem:[%s5 + $0x3] sm:$0x1]
    %v749 = vld [vmem:[%s5 + $0x4] sm:$0x1]
    %v750 = vld [vmem:[%s5 + $0x5] sm:$0x1]
    %v751 = vld [vmem:[%s5 + $0x6] sm:$0x1]
    %v752 = vld [vmem:[%s5 + $0x7] sm:$0x1]
    %v761 = vlaneseq
    %v762 = vshrl.u32 %v761, 7
    %v763 = vsub.s32 0, %v762
    %v764 = vrot.slane %v745, %v763
    %v765 = vlaneseq
    %v766 = vshrl.u32 %v765, 7
    %v767 = vsub.s32 0, %v766
    %v768 = vrot.slane %v746, %v767
    %v769 = vlaneseq
    %v770 = vshrl.u32 %v769, 7
    %v771 = vsub.s32 0, %v770
    %v772 = vrot.slane %v747, %v771
    %v773 = vlaneseq
    %v774 = vshrl.u32 %v773, 7
    %v775 = vsub.s32 0, %v774
    %v776 = vrot.slane %v748, %v775
    %v777 = vlaneseq
    %v778 = vshrl.u32 %v777, 7
    %v779 = vsub.s32 0, %v778
    %v780 = vrot.slane %v749, %v779
    %v781 = vlaneseq
    %v782 = vshrl.u32 %v781, 7
    %v783 = vsub.s32 0, %v782
    %v784 = vrot.slane %v750, %v783
    %v785 = vlaneseq
    %v786 = vshrl.u32 %v785, 7
    %v787 = vsub.s32 0, %v786
    %v788 = vrot.slane %v751, %v787
    %v789 = vlaneseq
    %v790 = vshrl.u32 %v789, 7
    %v791 = vsub.s32 0, %v790
    %v792 = vrot.slane %v752, %v791
    %801 = vmatprep.subr.mxu0 0.0
    %802 = vmatpush1.msra.mxu0 %v713
    %803 = vmatprep.subr.mxu0 0.0
    %804 = vmatpush1.msra.mxu0 %v714
    %805 = vmatprep.subr.mxu0 0.0
    %806 = vmatpush1.msra.mxu0 %v715
    %807 = vmatprep.subr.mxu0 0.0
    %808 = vmatpush1.msra.mxu0 %v716
    %809 = vmatprep.subr.mxu0 0.0
    %810 = vmatpush1.msra.mxu0 0.0
    %811 = vmatprep.subr.mxu0 0.0
    %812 = vmatpush1.msra.mxu0 0.0
    %813 = vmatprep.subr.mxu0 0.0
    %814 = vmatpush1.msra.mxu0 0.0
    %815 = vmatprep.subr.mxu0 0.0
    %816 = vmatpush1.msra.mxu0 0.0
    %817 = vmatprep.subr.mxu0 0.0
    %818 = vmatpush1.msra.mxu0 0.0
    %819 = vmatprep.subr.mxu0 0.0
    %820 = vmatpush1.msra.mxu0 0.0
    %821 = vmatprep.subr.mxu0 0.0
    %822 = vmatpush1.msra.mxu0 0.0
    %823 = vmatprep.subr.mxu0 0.0
    %824 = vmatpush1.msra.mxu0 0.0
    %825 = vmatprep.subr.mxu0 0.0
    %826 = vmatpush1.msra.mxu0 0.0
    %827 = vmatprep.subr.mxu0 0.0
    %828 = vmatpush1.msra.mxu0 0.0
    %829 = vmatprep.subr.mxu0 0.0
    %830 = vmatpush1.msra.mxu0 0.0
    %831 = vmatprep.subr.mxu0 0.0
    %832 = vmatpush1.msra.mxu0 0.0
    %833 = vmatprep.subr.mxu0 0.0
    %834 = vmatpush1.msra.mxu0 0.0
    %835 = vmatprep.subr.mxu0 0.0
    %836 = vmatpush1.msra.mxu0 0.0
    %837 = vmatprep.subr.mxu0 0.0
    %838 = vmatpush1.msra.mxu0 0.0
    %839 = vmatprep.subr.mxu0 0.0
    %840 = vmatpush1.msra.mxu0 0.0
    %841 = vmatprep.subr.mxu0 0.0
    %842 = vmatpush1.msra.mxu0 0.0
    %843 = vmatprep.subr.mxu0 0.0
    %844 = vmatpush1.msra.mxu0 0.0
    %845 = vmatprep.subr.mxu0 0.0
    %846 = vmatpush1.msra.mxu0 0.0
    %847 = vmatprep.subr.mxu0 0.0
    %848 = vmatpush1.msra.mxu0 0.0
    %849 = vmatprep.subr.mxu0 0.0
    %850 = vmatpush1.msra.mxu0 0.0
    %851 = vmatprep.subr.mxu0 0.0
    %852 = vmatpush1.msra.mxu0 0.0
    %853 = vmatprep.subr.mxu0 0.0
    %854 = vmatpush1.msra.mxu0 0.0
    %855 = vmatprep.subr.mxu0 0.0
    %856 = vmatpush1.msra.mxu0 0.0
    %857 = vmatprep.subr.mxu0 0.0
    %858 = vmatpush1.msra.mxu0 0.0
    %859 = vmatprep.subr.mxu0 0.0
    %860 = vmatpush1.msra.mxu0 0.0
    %861 = vmatprep.subr.mxu0 0.0
    %862 = vmatpush1.msra.mxu0 0.0
    %863 = vmatprep.subr.mxu0 0.0
    %864 = vmatpush1.msra.mxu0 0.0
    %865 = vmatprep.mubr.f32.mxu0 0.0
    %866 = vmatmul.mubr.f32.gmra.mrb[0].mxu0 %v130
    %v867 = vpop.f32.mrb[0].mxu0
    %v868 = vadd.f32 %v764, %v867
    %v869 = vpop.f32.mrb[0].mxu0
    %870 = vdwg.mxu0
    %871 = vmatprep.subr.mxu0 0.0
    %872 = vmatpush1.msra.mxu0 %v717
    %873 = vmatprep.subr.mxu0 0.0
    %874 = vmatpush1.msra.mxu0 %v718
    %875 = vmatprep.subr.mxu0 0.0
    %876 = vmatpush1.msra.mxu0 %v719
    %877 = vmatprep.subr.mxu0 0.0
    %878 = vmatpush1.msra.mxu0 %v720
    %879 = vmatprep.subr.mxu0 0.0
    %880 = vmatpush1.msra.mxu0 0.0
    %881 = vmatprep.subr.mxu0 0.0
    %882 = vmatpush1.msra.mxu0 0.0
    %883 = vmatprep.subr.mxu0 0.0
    %884 = vmatpush1.msra.mxu0 0.0
    %885 = vmatprep.subr.mxu0 0.0
    %886 = vmatpush1.msra.mxu0 0.0
    %887 = vmatprep.subr.mxu0 0.0
    %888 = vmatpush1.msra.mxu0 0.0
    %889 = vmatprep.subr.mxu0 0.0
    %890 = vmatpush1.msra.mxu0 0.0
    %891 = vmatprep.subr.mxu0 0.0
    %892 = vmatpush1.msra.mxu0 0.0
    %893 = vmatprep.subr.mxu0 0.0
    %894 = vmatpush1.msra.mxu0 0.0
    %895 = vmatprep.subr.mxu0 0.0
    %896 = vmatpush1.msra.mxu0 0.0
    %897 = vmatprep.subr.mxu0 0.0
    %898 = vmatpush1.msra.mxu0 0.0
    %899 = vmatprep.subr.mxu0 0.0
    %900 = vmatpush1.msra.mxu0 0.0
    %901 = vmatprep.subr.mxu0 0.0
    %902 = vmatpush1.msra.mxu0 0.0
    %903 = vmatprep.subr.mxu0 0.0
    %904 = vmatpush1.msra.mxu0 0.0
    %905 = vmatprep.subr.mxu0 0.0
    %906 = vmatpush1.msra.mxu0 0.0
    %907 = vmatprep.subr.mxu0 0.0
    %908 = vmatpush1.msra.mxu0 0.0
    %909 = vmatprep.subr.mxu0 0.0
    %910 = vmatpush1.msra.mxu0 0.0
    %911 = vmatprep.subr.mxu0 0.0
    %912 = vmatpush1.msra.mxu0 0.0
    %913 = vmatprep.subr.mxu0 0.0
    %914 = vmatpush1.msra.mxu0 0.0
    %915 = vmatprep.subr.mxu0 0.0
    %916 = vmatpush1.msra.mxu0 0.0
    %917 = vmatprep.subr.mxu0 0.0
    %918 = vmatpush1.msra.mxu0 0.0
    %919 = vmatprep.subr.mxu0 0.0
    %920 = vmatpush1.msra.mxu0 0.0
    %921 = vmatprep.subr.mxu0 0.0
    %922 = vmatpush1.msra.mxu0 0.0
    %923 = vmatprep.subr.mxu0 0.0
    %924 = vmatpush1.msra.mxu0 0.0
    %925 = vmatprep.subr.mxu0 0.0
    %926 = vmatpush1.msra.mxu0 0.0
    %927 = vmatprep.subr.mxu0 0.0
    %928 = vmatpush1.msra.mxu0 0.0
    %929 = vmatprep.subr.mxu0 0.0
    %930 = vmatpush1.msra.mxu0 0.0
    %931 = vmatprep.subr.mxu0 0.0
    %932 = vmatpush1.msra.mxu0 0.0
    %933 = vmatprep.subr.mxu0 0.0
    %934 = vmatpush1.msra.mxu0 0.0
    %935 = vmatprep.mubr.f32.mxu0 0.0
    %936 = vmatmul.mubr.f32.gmra.mrb[0].mxu0 %v203
    %v937 = vpop.f32.mrb[0].mxu0
    %v938 = vadd.f32 %v768, %v937
    %v939 = vpop.f32.mrb[0].mxu0
    %940 = vdwg.mxu0
    %941 = vmatprep.subr.mxu0 0.0
    %942 = vmatpush1.msra.mxu0 %v721
    %943 = vmatprep.subr.mxu0 0.0
    %944 = vmatpush1.msra.mxu0 %v722
    %945 = vmatprep.subr.mxu0 0.0
    %946 = vmatpush1.msra.mxu0 %v723
    %947 = vmatprep.subr.mxu0 0.0
    %948 = vmatpush1.msra.mxu0 %v724
    %949 = vmatprep.subr.mxu0 0.0
    %950 = vmatpush1.msra.mxu0 0.0
    %951 = vmatprep.subr.mxu0 0.0
    %952 = vmatpush1.msra.mxu0 0.0
    %953 = vmatprep.subr.mxu0 0.0
    %954 = vmatpush1.msra.mxu0 0.0
    %955 = vmatprep.subr.mxu0 0.0
    %956 = vmatpush1.msra.mxu0 0.0
    %957 = vmatprep.subr.mxu0 0.0
    %958 = vmatpush1.msra.mxu0 0.0
    %959 = vmatprep.subr.mxu0 0.0
    %960 = vmatpush1.msra.mxu0 0.0
    %961 = vmatprep.subr.mxu0 0.0
    %962 = vmatpush1.msra.mxu0 0.0
    %963 = vmatprep.subr.mxu0 0.0
    %964 = vmatpush1.msra.mxu0 0.0
    %965 = vmatprep.subr.mxu0 0.0
    %966 = vmatpush1.msra.mxu0 0.0
    %967 = vmatprep.subr.mxu0 0.0
    %968 = vmatpush1.msra.mxu0 0.0
    %969 = vmatprep.subr.mxu0 0.0
    %970 = vmatpush1.msra.mxu0 0.0
    %971 = vmatprep.subr.mxu0 0.0
    %972 = vmatpush1.msra.mxu0 0.0
    %973 = vmatprep.subr.mxu0 0.0
    %974 = vmatpush1.msra.mxu0 0.0
    %975 = vmatprep.subr.mxu0 0.0
    %976 = vmatpush1.msra.mxu0 0.0
    %977 = vmatprep.subr.mxu0 0.0
    %978 = vmatpush1.msra.mxu0 0.0
    %979 = vmatprep.subr.mxu0 0.0
    %980 = vmatpush1.msra.mxu0 0.0
    %981 = vmatprep.subr.mxu0 0.0
    %982 = vmatpush1.msra.mxu0 0.0
    %983 = vmatprep.subr.mxu0 0.0
    %984 = vmatpush1.msra.mxu0 0.0
    %985 = vmatprep.subr.mxu0 0.0
    %986 = vmatpush1.msra.mxu0 0.0
    %987 = vmatprep.subr.mxu0 0.0
    %988 = vmatpush1.msra.mxu0 0.0
    %989 = vmatprep.subr.mxu0 0.0
    %990 = vmatpush1.msra.mxu0 0.0
    %991 = vmatprep.subr.mxu0 0.0
    %992 = vmatpush1.msra.mxu0 0.0
    %993 = vmatprep.subr.mxu0 0.0
    %994 = vmatpush1.msra.mxu0 0.0
    %995 = vmatprep.subr.mxu0 0.0
    %996 = vmatpush1.msra.mxu0 0.0
    %997 = vmatprep.subr.mxu0 0.0
    %998 = vmatpush1.msra.mxu0 0.0
    %999 = vmatprep.subr.mxu0 0.0
    %1000 = vmatpush1.msra.mxu0 0.0
    %1001 = vmatprep.subr.mxu0 0.0
    %1002 = vmatpush1.msra.mxu0 0.0
    %1003 = vmatprep.subr.mxu0 0.0
    %1004 = vmatpush1.msra.mxu0 0.0
    %1005 = vmatprep.mubr.f32.mxu0 0.0
    %1006 = vmatmul.mubr.f32.gmra.mrb[0].mxu0 %v276
    %v1007 = vpop.f32.mrb[0].mxu0
    %v1008 = vadd.f32 %v772, %v1007
    %v1009 = vpop.f32.mrb[0].mxu0
    %1010 = vdwg.mxu0
    %1011 = vmatprep.subr.mxu0 0.0
    %1012 = vmatpush1.msra.mxu0 %v725
    %1013 = vmatprep.subr.mxu0 0.0
    %1014 = vmatpush1.msra.mxu0 %v726
    %1015 = vmatprep.subr.mxu0 0.0
    %1016 = vmatpush1.msra.mxu0 %v727
    %1017 = vmatprep.subr.mxu0 0.0
    %1018 = vmatpush1.msra.mxu0 %v728
    %1019 = vmatprep.subr.mxu0 0.0
    %1020 = vmatpush1.msra.mxu0 0.0
    %1021 = vmatprep.subr.mxu0 0.0
    %1022 = vmatpush1.msra.mxu0 0.0
    %1023 = vmatprep.subr.mxu0 0.0
    %1024 = vmatpush1.msra.mxu0 0.0
    %1025 = vmatprep.subr.mxu0 0.0
    %1026 = vmatpush1.msra.mxu0 0.0
    %1027 = vmatprep.subr.mxu0 0.0
    %1028 = vmatpush1.msra.mxu0 0.0
    %1029 = vmatprep.subr.mxu0 0.0
    %1030 = vmatpush1.msra.mxu0 0.0
    %1031 = vmatprep.subr.mxu0 0.0
    %1032 = vmatpush1.msra.mxu0 0.0
    %1033 = vmatprep.subr.mxu0 0.0
    %1034 = vmatpush1.msra.mxu0 0.0
    %1035 = vmatprep.subr.mxu0 0.0
    %1036 = vmatpush1.msra.mxu0 0.0
    %1037 = vmatprep.subr.mxu0 0.0
    %1038 = vmatpush1.msra.mxu0 0.0
    %1039 = vmatprep.subr.mxu0 0.0
    %1040 = vmatpush1.msra.mxu0 0.0
    %1041 = vmatprep.subr.mxu0 0.0
    %1042 = vmatpush1.msra.mxu0 0.0
    %1043 = vmatprep.subr.mxu0 0.0
    %1044 = vmatpush1.msra.mxu0 0.0
    %1045 = vmatprep.subr.mxu0 0.0
    %1046 = vmatpush1.msra.mxu0 0.0
    %1047 = vmatprep.subr.mxu0 0.0
    %1048 = vmatpush1.msra.mxu0 0.0
    %1049 = vmatprep.subr.mxu0 0.0
    %1050 = vmatpush1.msra.mxu0 0.0
    %1051 = vmatprep.subr.mxu0 0.0
    %1052 = vmatpush1.msra.mxu0 0.0
    %1053 = vmatprep.subr.mxu0 0.0
    %1054 = vmatpush1.msra.mxu0 0.0
    %1055 = vmatprep.subr.mxu0 0.0
    %1056 = vmatpush1.msra.mxu0 0.0
    %1057 = vmatprep.subr.mxu0 0.0
    %1058 = vmatpush1.msra.mxu0 0.0
    %1059 = vmatprep.subr.mxu0 0.0
    %1060 = vmatpush1.msra.mxu0 0.0
    %1061 = vmatprep.subr.mxu0 0.0
    %1062 = vmatpush1.msra.mxu0 0.0
    %1063 = vmatprep.subr.mxu0 0.0
    %1064 = vmatpush1.msra.mxu0 0.0
    %1065 = vmatprep.subr.mxu0 0.0
    %1066 = vmatpush1.msra.mxu0 0.0
    %1067 = vmatprep.subr.mxu0 0.0
    %1068 = vmatpush1.msra.mxu0 0.0
    %1069 = vmatprep.subr.mxu0 0.0
    %1070 = vmatpush1.msra.mxu0 0.0
    %1071 = vmatprep.subr.mxu0 0.0
    %1072 = vmatpush1.msra.mxu0 0.0
    %1073 = vmatprep.subr.mxu0 0.0
    %1074 = vmatpush1.msra.mxu0 0.0
    %1075 = vmatprep.mubr.f32.mxu0 0.0
    %1076 = vmatmul.mubr.f32.gmra.mrb[0].mxu0 %v349
    %v1077 = vpop.f32.mrb[0].mxu0
    %v1078 = vadd.f32 %v776, %v1077
    %v1079 = vpop.f32.mrb[0].mxu0
    %1080 = vdwg.mxu0
    %1081 = vmatprep.subr.mxu0 0.0
    %1082 = vmatpush1.msra.mxu0 %v729
    %1083 = vmatprep.subr.mxu0 0.0
    %1084 = vmatpush1.msra.mxu0 %v730
    %1085 = vmatprep.subr.mxu0 0.0
    %1086 = vmatpush1.msra.mxu0 %v731
    %1087 = vmatprep.subr.mxu0 0.0
    %1088 = vmatpush1.msra.mxu0 %v732
    %1089 = vmatprep.subr.mxu0 0.0
    %1090 = vmatpush1.msra.mxu0 0.0
    %1091 = vmatprep.subr.mxu0 0.0
    %1092 = vmatpush1.msra.mxu0 0.0
    %1093 = vmatprep.subr.mxu0 0.0
    %1094 = vmatpush1.msra.mxu0 0.0
    %1095 = vmatprep.subr.mxu0 0.0
    %1096 = vmatpush1.msra.mxu0 0.0
    %1097 = vmatprep.subr.mxu0 0.0
    %1098 = vmatpush1.msra.mxu0 0.0
    %1099 = vmatprep.subr.mxu0 0.0
    %1100 = vmatpush1.msra.mxu0 0.0
    %1101 = vmatprep.subr.mxu0 0.0
    %1102 = vmatpush1.msra.mxu0 0.0
    %1103 = vmatprep.subr.mxu0 0.0
    %1104 = vmatpush1.msra.mxu0 0.0
    %1105 = vmatprep.subr.mxu0 0.0
    %1106 = vmatpush1.msra.mxu0 0.0
    %1107 = vmatprep.subr.mxu0 0.0
    %1108 = vmatpush1.msra.mxu0 0.0
    %1109 = vmatprep.subr.mxu0 0.0
    %1110 = vmatpush1.msra.mxu0 0.0
    %1111 = vmatprep.subr.mxu0 0.0
    %1112 = vmatpush1.msra.mxu0 0.0
    %1113 = vmatprep.subr.mxu0 0.0
    %1114 = vmatpush1.msra.mxu0 0.0
    %1115 = vmatprep.subr.mxu0 0.0
    %1116 = vmatpush1.msra.mxu0 0.0
    %1117 = vmatprep.subr.mxu0 0.0
    %1118 = vmatpush1.msra.mxu0 0.0
    %1119 = vmatprep.subr.mxu0 0.0
    %1120 = vmatpush1.msra.mxu0 0.0
    %1121 = vmatprep.subr.mxu0 0.0
    %1122 = vmatpush1.msra.mxu0 0.0
    %1123 = vmatprep.subr.mxu0 0.0
    %1124 = vmatpush1.msra.mxu0 0.0
    %1125 = vmatprep.subr.mxu0 0.0
    %1126 = vmatpush1.msra.mxu0 0.0
    %1127 = vmatprep.subr.mxu0 0.0
    %1128 = vmatpush1.msra.mxu0 0.0
    %1129 = vmatprep.subr.mxu0 0.0
    %1130 = vmatpush1.msra.mxu0 0.0
    %1131 = vmatprep.subr.mxu0 0.0
    %1132 = vmatpush1.msra.mxu0 0.0
    %1133 = vmatprep.subr.mxu0 0.0
    %1134 = vmatpush1.msra.mxu0 0.0
    %1135 = vmatprep.subr.mxu0 0.0
    %1136 = vmatpush1.msra.mxu0 0.0
    %1137 = vmatprep.subr.mxu0 0.0
    %1138 = vmatpush1.msra.mxu0 0.0
    %1139 = vmatprep.subr.mxu0 0.0
    %1140 = vmatpush1.msra.mxu0 0.0
    %1141 = vmatprep.subr.mxu0 0.0
    %1142 = vmatpush1.msra.mxu0 0.0
    %1143 = vmatprep.subr.mxu0 0.0
    %1144 = vmatpush1.msra.mxu0 0.0
    %1145 = vmatprep.mubr.f32.mxu0 0.0
    %1146 = vmatmul.mubr.f32.gmra.mrb[0].mxu0 %v422
    %v1147 = vpop.f32.mrb[0].mxu0
    %v1148 = vadd.f32 %v780, %v1147
    %v1149 = vpop.f32.mrb[0].mxu0
    %1150 = vdwg.mxu0
    %1151 = vmatprep.subr.mxu0 0.0
    %1152 = vmatpush1.msra.mxu0 %v733
    %1153 = vmatprep.subr.mxu0 0.0
    %1154 = vmatpush1.msra.mxu0 %v734
    %1155 = vmatprep.subr.mxu0 0.0
    %1156 = vmatpush1.msra.mxu0 %v735
    %1157 = vmatprep.subr.mxu0 0.0
    %1158 = vmatpush1.msra.mxu0 %v736
    %1159 = vmatprep.subr.mxu0 0.0
    %1160 = vmatpush1.msra.mxu0 0.0
    %1161 = vmatprep.subr.mxu0 0.0
    %1162 = vmatpush1.msra.mxu0 0.0
    %1163 = vmatprep.subr.mxu0 0.0
    %1164 = vmatpush1.msra.mxu0 0.0
    %1165 = vmatprep.subr.mxu0 0.0
    %1166 = vmatpush1.msra.mxu0 0.0
    %1167 = vmatprep.subr.mxu0 0.0
    %1168 = vmatpush1.msra.mxu0 0.0
    %1169 = vmatprep.subr.mxu0 0.0
    %1170 = vmatpush1.msra.mxu0 0.0
    %1171 = vmatprep.subr.mxu0 0.0
    %1172 = vmatpush1.msra.mxu0 0.0
    %1173 = vmatprep.subr.mxu0 0.0
    %1174 = vmatpush1.msra.mxu0 0.0
    %1175 = vmatprep.subr.mxu0 0.0
    %1176 = vmatpush1.msra.mxu0 0.0
    %1177 = vmatprep.subr.mxu0 0.0
    %1178 = vmatpush1.msra.mxu0 0.0
    %1179 = vmatprep.subr.mxu0 0.0
    %1180 = vmatpush1.msra.mxu0 0.0
    %1181 = vmatprep.subr.mxu0 0.0
    %1182 = vmatpush1.msra.mxu0 0.0
    %1183 = vmatprep.subr.mxu0 0.0
    %1184 = vmatpush1.msra.mxu0 0.0
    %1185 = vmatprep.subr.mxu0 0.0
    %1186 = vmatpush1.msra.mxu0 0.0
    %1187 = vmatprep.subr.mxu0 0.0
    %1188 = vmatpush1.msra.mxu0 0.0
    %1189 = vmatprep.subr.mxu0 0.0
    %1190 = vmatpush1.msra.mxu0 0.0
    %1191 = vmatprep.subr.mxu0 0.0
    %1192 = vmatpush1.msra.mxu0 0.0
    %1193 = vmatprep.subr.mxu0 0.0
    %1194 = vmatpush1.msra.mxu0 0.0
    %1195 = vmatprep.subr.mxu0 0.0
    %1196 = vmatpush1.msra.mxu0 0.0
    %1197 = vmatprep.subr.mxu0 0.0
    %1198 = vmatpush1.msra.mxu0 0.0
    %1199 = vmatprep.subr.mxu0 0.0
    %1200 = vmatpush1.msra.mxu0 0.0
    %1201 = vmatprep.subr.mxu0 0.0
    %1202 = vmatpush1.msra.mxu0 0.0
    %1203 = vmatprep.subr.mxu0 0.0
    %1204 = vmatpush1.msra.mxu0 0.0
    %1205 = vmatprep.subr.mxu0 0.0
    %1206 = vmatpush1.msra.mxu0 0.0
    %1207 = vmatprep.subr.mxu0 0.0
    %1208 = vmatpush1.msra.mxu0 0.0
    %1209 = vmatprep.subr.mxu0 0.0
    %1210 = vmatpush1.msra.mxu0 0.0
    %1211 = vmatprep.subr.mxu0 0.0
    %1212 = vmatpush1.msra.mxu0 0.0
    %1213 = vmatprep.subr.mxu0 0.0
    %1214 = vmatpush1.msra.mxu0 0.0
    %1215 = vmatprep.mubr.f32.mxu0 0.0
    %1216 = vmatmul.mubr.f32.gmra.mrb[0].mxu0 %v495
    %v1217 = vpop.f32.mrb[0].mxu0
    %v1218 = vadd.f32 %v784, %v1217
    %v1219 = vpop.f32.mrb[0].mxu0
    %1220 = vdwg.mxu0
    %1221 = vmatprep.subr.mxu0 0.0
    %1222 = vmatpush1.msra.mxu0 %v737
    %1223 = vmatprep.subr.mxu0 0.0
    %1224 = vmatpush1.msra.mxu0 %v738
    %1225 = vmatprep.subr.mxu0 0.0
    %1226 = vmatpush1.msra.mxu0 %v739
    %1227 = vmatprep.subr.mxu0 0.0
    %1228 = vmatpush1.msra.mxu0 %v740
    %1229 = vmatprep.subr.mxu0 0.0
    %1230 = vmatpush1.msra.mxu0 0.0
    %1231 = vmatprep.subr.mxu0 0.0
    %1232 = vmatpush1.msra.mxu0 0.0
    %1233 = vmatprep.subr.mxu0 0.0
    %1234 = vmatpush1.msra.mxu0 0.0
    %1235 = vmatprep.subr.mxu0 0.0
    %1236 = vmatpush1.msra.mxu0 0.0
    %1237 = vmatprep.subr.mxu0 0.0
    %1238 = vmatpush1.msra.mxu0 0.0
    %1239 = vmatprep.subr.mxu0 0.0
    %1240 = vmatpush1.msra.mxu0 0.0
    %1241 = vmatprep.subr.mxu0 0.0
    %1242 = vmatpush1.msra.mxu0 0.0
    %1243 = vmatprep.subr.mxu0 0.0
    %1244 = vmatpush1.msra.mxu0 0.0
    %1245 = vmatprep.subr.mxu0 0.0
    %1246 = vmatpush1.msra.mxu0 0.0
    %1247 = vmatprep.subr.mxu0 0.0
    %1248 = vmatpush1.msra.mxu0 0.0
    %1249 = vmatprep.subr.mxu0 0.0
    %1250 = vmatpush1.msra.mxu0 0.0
    %1251 = vmatprep.subr.mxu0 0.0
    %1252 = vmatpush1.msra.mxu0 0.0
    %1253 = vmatprep.subr.mxu0 0.0
    %1254 = vmatpush1.msra.mxu0 0.0
    %1255 = vmatprep.subr.mxu0 0.0
    %1256 = vmatpush1.msra.mxu0 0.0
    %1257 = vmatprep.subr.mxu0 0.0
    %1258 = vmatpush1.msra.mxu0 0.0
    %1259 = vmatprep.subr.mxu0 0.0
    %1260 = vmatpush1.msra.mxu0 0.0
    %1261 = vmatprep.subr.mxu0 0.0
    %1262 = vmatpush1.msra.mxu0 0.0
    %1263 = vmatprep.subr.mxu0 0.0
    %1264 = vmatpush1.msra.mxu0 0.0
    %1265 = vmatprep.subr.mxu0 0.0
    %1266 = vmatpush1.msra.mxu0 0.0
    %1267 = vmatprep.subr.mxu0 0.0
    %1268 = vmatpush1.msra.mxu0 0.0
    %1269 = vmatprep.subr.mxu0 0.0
    %1270 = vmatpush1.msra.mxu0 0.0
    %1271 = vmatprep.subr.mxu0 0.0
    %1272 = vmatpush1.msra.mxu0 0.0
    %1273 = vmatprep.subr.mxu0 0.0
    %1274 = vmatpush1.msra.mxu0 0.0
    %1275 = vmatprep.subr.mxu0 0.0
    %1276 = vmatpush1.msra.mxu0 0.0
    %1277 = vmatprep.subr.mxu0 0.0
    %1278 = vmatpush1.msra.mxu0 0.0
    %1279 = vmatprep.subr.mxu0 0.0
    %1280 = vmatpush1.msra.mxu0 0.0
    %1281 = vmatprep.subr.mxu0 0.0
    %1282 = vmatpush1.msra.mxu0 0.0
    %1283 = vmatprep.subr.mxu0 0.0
    %1284 = vmatpush1.msra.mxu0 0.0
    %1285 = vmatprep.mubr.f32.mxu0 0.0
    %1286 = vmatmul.mubr.f32.gmra.mrb[0].mxu0 %v568
    %v1287 = vpop.f32.mrb[0].mxu0
    %v1288 = vadd.f32 %v788, %v1287
    %v1289 = vpop.f32.mrb[0].mxu0
    %1290 = vdwg.mxu0
    %1291 = vmatprep.subr.mxu0 0.0
    %1292 = vmatpush1.msra.mxu0 %v741
    %1293 = vmatprep.subr.mxu0 0.0
    %1294 = vmatpush1.msra.mxu0 %v742
    %1295 = vmatprep.subr.mxu0 0.0
    %1296 = vmatpush1.msra.mxu0 %v743
    %1297 = vmatprep.subr.mxu0 0.0
    %1298 = vmatpush1.msra.mxu0 %v744
    %1299 = vmatprep.subr.mxu0 0.0
    %1300 = vmatpush1.msra.mxu0 0.0
    %1301 = vmatprep.subr.mxu0 0.0
    %1302 = vmatpush1.msra.mxu0 0.0
    %1303 = vmatprep.subr.mxu0 0.0
    %1304 = vmatpush1.msra.mxu0 0.0
    %1305 = vmatprep.subr.mxu0 0.0
    %1306 = vmatpush1.msra.mxu0 0.0
    %1307 = vmatprep.subr.mxu0 0.0
    %1308 = vmatpush1.msra.mxu0 0.0
    %1309 = vmatprep.subr.mxu0 0.0
    %1310 = vmatpush1.msra.mxu0 0.0
    %1311 = vmatprep.subr.mxu0 0.0
    %1312 = vmatpush1.msra.mxu0 0.0
    %1313 = vmatprep.subr.mxu0 0.0
    %1314 = vmatpush1.msra.mxu0 0.0
    %1315 = vmatprep.subr.mxu0 0.0
    %1316 = vmatpush1.msra.mxu0 0.0
    %1317 = vmatprep.subr.mxu0 0.0
    %1318 = vmatpush1.msra.mxu0 0.0
    %1319 = vmatprep.subr.mxu0 0.0
    %1320 = vmatpush1.msra.mxu0 0.0
    %1321 = vmatprep.subr.mxu0 0.0
    %1322 = vmatpush1.msra.mxu0 0.0
    %1323 = vmatprep.subr.mxu0 0.0
    %1324 = vmatpush1.msra.mxu0 0.0
    %1325 = vmatprep.subr.mxu0 0.0
    %1326 = vmatpush1.msra.mxu0 0.0
    %1327 = vmatprep.subr.mxu0 0.0
    %1328 = vmatpush1.msra.mxu0 0.0
    %1329 = vmatprep.subr.mxu0 0.0
    %1330 = vmatpush1.msra.mxu0 0.0
    %1331 = vmatprep.subr.mxu0 0.0
    %1332 = vmatpush1.msra.mxu0 0.0
    %1333 = vmatprep.subr.mxu0 0.0
    %1334 = vmatpush1.msra.mxu0 0.0
    %1335 = vmatprep.subr.mxu0 0.0
    %1336 = vmatpush1.msra.mxu0 0.0
    %1337 = vmatprep.subr.mxu0 0.0
    %1338 = vmatpush1.msra.mxu0 0.0
    %1339 = vmatprep.subr.mxu0 0.0
    %1340 = vmatpush1.msra.mxu0 0.0
    %1341 = vmatprep.subr.mxu0 0.0
    %1342 = vmatpush1.msra.mxu0 0.0
    %1343 = vmatprep.subr.mxu0 0.0
    %1344 = vmatpush1.msra.mxu0 0.0
    %1345 = vmatprep.subr.mxu0 0.0
    %1346 = vmatpush1.msra.mxu0 0.0
    %1347 = vmatprep.subr.mxu0 0.0
    %1348 = vmatpush1.msra.mxu0 0.0
    %1349 = vmatprep.subr.mxu0 0.0
    %1350 = vmatpush1.msra.mxu0 0.0
    %1351 = vmatprep.subr.mxu0 0.0
    %1352 = vmatpush1.msra.mxu0 0.0
    %1353 = vmatprep.subr.mxu0 0.0
    %1354 = vmatpush1.msra.mxu0 0.0
    %1355 = vmatprep.mubr.f32.mxu0 0.0
    %1356 = vmatmul.mubr.f32.gmra.mrb[0].mxu0 %v641
    %v1357 = vpop.f32.mrb[0].mxu0
    %v1358 = vadd.f32 %v792, %v1357
    %v1359 = vpop.f32.mrb[0].mxu0
    %1360 = vdwg.mxu0
    %vm1361 = vcmask 64512
    %v1363 = vsel %vm1361, %v199, 0
    %v1366 = vsel %vm1361, %v32, 0
    %1368 = vmatprep.subr.mxu0 0.0
    %1369 = vmatpush1.xpose.msra.mxu0 %v1366
    %1370 = vmatprep.subr.mxu0 0.0
    %1371 = vmatpush1.xpose.msra.mxu0 0.0
    %1372 = vmatprep.subr.mxu0 0.0
    %1373 = vmatpush1.xpose.msra.mxu0 0.0
    %1374 = vmatprep.subr.mxu0 0.0
    %1375 = vmatpush1.xpose.msra.mxu0 0.0
    %1376 = vmatprep.subr.mxu0 0.0
    %1377 = vmatpush1.xpose.msra.mxu0 0.0
    %1378 = vmatprep.subr.mxu0 0.0
    %1379 = vmatpush1.xpose.msra.mxu0 0.0
    %1380 = vmatprep.subr.mxu0 0.0
    %1381 = vmatpush1.xpose.msra.mxu0 0.0
    %1382 = vmatprep.subr.mxu0 0.0
    %1383 = vmatpush1.xpose.msra.mxu0 0.0
    %1384 = vmatprep.subr.mxu0 0.0
    %1385 = vmatpush1.xpose.msra.mxu0 0.0
    %1386 = vmatprep.subr.mxu0 0.0
    %1387 = vmatpush1.xpose.msra.mxu0 0.0
    %1388 = vmatprep.subr.mxu0 0.0
    %1389 = vmatpush1.xpose.msra.mxu0 0.0
    %1390 = vmatprep.subr.mxu0 0.0
    %1391 = vmatpush1.xpose.msra.mxu0 0.0
    %1392 = vmatprep.subr.mxu0 0.0
    %1393 = vmatpush1.xpose.msra.mxu0 0.0
    %1394 = vmatprep.subr.mxu0 0.0
    %1395 = vmatpush1.xpose.msra.mxu0 0.0
    %1396 = vmatprep.subr.mxu0 0.0
    %1397 = vmatpush1.xpose.msra.mxu0 0.0
    %1398 = vmatprep.subr.mxu0 0.0
    %1399 = vmatpush1.xpose.msra.mxu0 0.0
    %1400 = vmatprep.subr.mxu0 0.0
    %1401 = vmatpush1.xpose.msra.mxu0 0.0
    %1402 = vmatprep.subr.mxu0 0.0
    %1403 = vmatpush1.xpose.msra.mxu0 0.0
    %1404 = vmatprep.subr.mxu0 0.0
    %1405 = vmatpush1.xpose.msra.mxu0 0.0
    %1406 = vmatprep.subr.mxu0 0.0
    %1407 = vmatpush1.xpose.msra.mxu0 0.0
    %1408 = vmatprep.subr.mxu0 0.0
    %1409 = vmatpush1.xpose.msra.mxu0 0.0
    %1410 = vmatprep.subr.mxu0 0.0
    %1411 = vmatpush1.xpose.msra.mxu0 0.0
    %1412 = vmatprep.subr.mxu0 0.0
    %1413 = vmatpush1.xpose.msra.mxu0 0.0
    %1414 = vmatprep.subr.mxu0 0.0
    %1415 = vmatpush1.xpose.msra.mxu0 0.0
    %1416 = vmatprep.subr.mxu0 0.0
    %1417 = vmatpush1.xpose.msra.mxu0 0.0
    %1418 = vmatprep.subr.mxu0 0.0
    %1419 = vmatpush1.xpose.msra.mxu0 0.0
    %1420 = vmatprep.subr.mxu0 0.0
    %1421 = vmatpush1.xpose.msra.mxu0 0.0
    %1422 = vmatprep.subr.mxu0 0.0
    %1423 = vmatpush1.xpose.msra.mxu0 0.0
    %1424 = vmatprep.subr.mxu0 0.0
    %1425 = vmatpush1.xpose.msra.mxu0 0.0
    %1426 = vmatprep.subr.mxu0 0.0
    %1427 = vmatpush1.xpose.msra.mxu0 0.0
    %1428 = vmatprep.subr.mxu0 0.0
    %1429 = vmatpush1.xpose.msra.mxu0 0.0
    %1430 = vmatprep.subr.mxu0 0.0
    %1431 = vmatpush1.xpose.msra.mxu0 0.0
    %1432 = vmatprep.mubr.f32.mxu0 0.0
    %1433 = vmatmul.mubr.f32.gmra.mrb[0].mxu0 %v1363
    %v1434 = vpop.f32.mrb[0].mxu0
    %v1435 = vadd.f32 0.0, %v1434
    %v1436 = vpop.f32.mrb[0].mxu0
    %1437 = vdwg.mxu0
    %v1439 = vsel %vm1361, %v272, 0
    %v1442 = vsel %vm1361, %v33, 0
    %1444 = vmatprep.subr.mxu0 0.0
    %1445 = vmatpush1.xpose.msra.mxu0 %v1442
    %1446 = vmatprep.subr.mxu0 0.0
    %1447 = vmatpush1.xpose.msra.mxu0 0.0
    %1448 = vmatprep.subr.mxu0 0.0
    %1449 = vmatpush1.xpose.msra.mxu0 0.0
    %1450 = vmatprep.subr.mxu0 0.0
    %1451 = vmatpush1.xpose.msra.mxu0 0.0
    %1452 = vmatprep.subr.mxu0 0.0
    %1453 = vmatpush1.xpose.msra.mxu0 0.0
    %1454 = vmatprep.subr.mxu0 0.0
    %1455 = vmatpush1.xpose.msra.mxu0 0.0
    %1456 = vmatprep.subr.mxu0 0.0
    %1457 = vmatpush1.xpose.msra.mxu0 0.0
    %1458 = vmatprep.subr.mxu0 0.0
    %1459 = vmatpush1.xpose.msra.mxu0 0.0
    %1460 = vmatprep.subr.mxu0 0.0
    %1461 = vmatpush1.xpose.msra.mxu0 0.0
    %1462 = vmatprep.subr.mxu0 0.0
    %1463 = vmatpush1.xpose.msra.mxu0 0.0
    %1464 = vmatprep.subr.mxu0 0.0
    %1465 = vmatpush1.xpose.msra.mxu0 0.0
    %1466 = vmatprep.subr.mxu0 0.0
    %1467 = vmatpush1.xpose.msra.mxu0 0.0
    %1468 = vmatprep.subr.mxu0 0.0
    %1469 = vmatpush1.xpose.msra.mxu0 0.0
    %1470 = vmatprep.subr.mxu0 0.0
    %1471 = vmatpush1.xpose.msra.mxu0 0.0
    %1472 = vmatprep.subr.mxu0 0.0
    %1473 = vmatpush1.xpose.msra.mxu0 0.0
    %1474 = vmatprep.subr.mxu0 0.0
    %1475 = vmatpush1.xpose.msra.mxu0 0.0
    %1476 = vmatprep.subr.mxu0 0.0
    %1477 = vmatpush1.xpose.msra.mxu0 0.0
    %1478 = vmatprep.subr.mxu0 0.0
    %1479 = vmatpush1.xpose.msra.mxu0 0.0
    %1480 = vmatprep.subr.mxu0 0.0
    %1481 = vmatpush1.xpose.msra.mxu0 0.0
    %1482 = vmatprep.subr.mxu0 0.0
    %1483 = vmatpush1.xpose.msra.mxu0 0.0
    %1484 = vmatprep.subr.mxu0 0.0
    %1485 = vmatpush1.xpose.msra.mxu0 0.0
    %1486 = vmatprep.subr.mxu0 0.0
    %1487 = vmatpush1.xpose.msra.mxu0 0.0
    %1488 = vmatprep.subr.mxu0 0.0
    %1489 = vmatpush1.xpose.msra.mxu0 0.0
    %1490 = vmatprep.subr.mxu0 0.0
    %1491 = vmatpush1.xpose.msra.mxu0 0.0
    %1492 = vmatprep.subr.mxu0 0.0
    %1493 = vmatpush1.xpose.msra.mxu0 0.0
    %1494 = vmatprep.subr.mxu0 0.0
    %1495 = vmatpush1.xpose.msra.mxu0 0.0
    %1496 = vmatprep.subr.mxu0 0.0
    %1497 = vmatpush1.xpose.msra.mxu0 0.0
    %1498 = vmatprep.subr.mxu0 0.0
    %1499 = vmatpush1.xpose.msra.mxu0 0.0
    %1500 = vmatprep.subr.mxu0 0.0
    %1501 = vmatpush1.xpose.msra.mxu0 0.0
    %1502 = vmatprep.subr.mxu0 0.0
    %1503 = vmatpush1.xpose.msra.mxu0 0.0
    %1504 = vmatprep.subr.mxu0 0.0
    %1505 = vmatpush1.xpose.msra.mxu0 0.0
    %1506 = vmatprep.subr.mxu0 0.0
    %1507 = vmatpush1.xpose.msra.mxu0 0.0
    %1508 = vmatprep.mubr.f32.mxu0 0.0
    %1509 = vmatmul.mubr.f32.gmra.mrb[0].mxu0 %v1439
    %v1510 = vpop.f32.mrb[0].mxu0
    %v1511 = vadd.f32 0.0, %v1510
    %v1512 = vpop.f32.mrb[0].mxu0
    %1513 = vdwg.mxu0
    %v1515 = vsel %vm1361, %v345, 0
    %v1518 = vsel %vm1361, %v34, 0
    %1520 = vmatprep.subr.mxu0 0.0
    %1521 = vmatpush1.xpose.msra.mxu0 %v1518
    %1522 = vmatprep.subr.mxu0 0.0
    %1523 = vmatpush1.xpose.msra.mxu0 0.0
    %1524 = vmatprep.subr.mxu0 0.0
    %1525 = vmatpush1.xpose.msra.mxu0 0.0
    %1526 = vmatprep.subr.mxu0 0.0
    %1527 = vmatpush1.xpose.msra.mxu0 0.0
    %1528 = vmatprep.subr.mxu0 0.0
    %1529 = vmatpush1.xpose.msra.mxu0 0.0
    %1530 = vmatprep.subr.mxu0 0.0
    %1531 = vmatpush1.xpose.msra.mxu0 0.0
    %1532 = vmatprep.subr.mxu0 0.0
    %1533 = vmatpush1.xpose.msra.mxu0 0.0
    %1534 = vmatprep.subr.mxu0 0.0
    %1535 = vmatpush1.xpose.msra.mxu0 0.0
    %1536 = vmatprep.subr.mxu0 0.0
    %1537 = vmatpush1.xpose.msra.mxu0 0.0
    %1538 = vmatprep.subr.mxu0 0.0
    %1539 = vmatpush1.xpose.msra.mxu0 0.0
    %1540 = vmatprep.subr.mxu0 0.0
    %1541 = vmatpush1.xpose.msra.mxu0 0.0
    %1542 = vmatprep.subr.mxu0 0.0
    %1543 = vmatpush1.xpose.msra.mxu0 0.0
    %1544 = vmatprep.subr.mxu0 0.0
    %1545 = vmatpush1.xpose.msra.mxu0 0.0
    %1546 = vmatprep.subr.mxu0 0.0
    %1547 = vmatpush1.xpose.msra.mxu0 0.0
    %1548 = vmatprep.subr.mxu0 0.0
    %1549 = vmatpush1.xpose.msra.mxu0 0.0
    %1550 = vmatprep.subr.mxu0 0.0
    %1551 = vmatpush1.xpose.msra.mxu0 0.0
    %1552 = vmatprep.subr.mxu0 0.0
    %1553 = vmatpush1.xpose.msra.mxu0 0.0
    %1554 = vmatprep.subr.mxu0 0.0
    %1555 = vmatpush1.xpose.msra.mxu0 0.0
    %1556 = vmatprep.subr.mxu0 0.0
    %1557 = vmatpush1.xpose.msra.mxu0 0.0
    %1558 = vmatprep.subr.mxu0 0.0
    %1559 = vmatpush1.xpose.msra.mxu0 0.0
    %1560 = vmatprep.subr.mxu0 0.0
    %1561 = vmatpush1.xpose.msra.mxu0 0.0
    %1562 = vmatprep.subr.mxu0 0.0
    %1563 = vmatpush1.xpose.msra.mxu0 0.0
    %1564 = vmatprep.subr.mxu0 0.0
    %1565 = vmatpush1.xpose.msra.mxu0 0.0
    %1566 = vmatprep.subr.mxu0 0.0
    %1567 = vmatpush1.xpose.msra.mxu0 0.0
    %1568 = vmatprep.subr.mxu0 0.0
    %1569 = vmatpush1.xpose.msra.mxu0 0.0
    %1570 = vmatprep.subr.mxu0 0.0
    %1571 = vmatpush1.xpose.msra.mxu0 0.0
    %1572 = vmatprep.subr.mxu0 0.0
    %1573 = vmatpush1.xpose.msra.mxu0 0.0
    %1574 = vmatprep.subr.mxu0 0.0
    %1575 = vmatpush1.xpose.msra.mxu0 0.0
    %1576 = vmatprep.subr.mxu0 0.0
    %1577 = vmatpush1.xpose.msra.mxu0 0.0
    %1578 = vmatprep.subr.mxu0 0.0
    %1579 = vmatpush1.xpose.msra.mxu0 0.0
    %1580 = vmatprep.subr.mxu0 0.0
    %1581 = vmatpush1.xpose.msra.mxu0 0.0
    %1582 = vmatprep.subr.mxu0 0.0
    %1583 = vmatpush1.xpose.msra.mxu0 0.0
    %1584 = vmatprep.mubr.f32.mxu0 0.0
    %1585 = vmatmul.mubr.f32.gmra.mrb[0].mxu0 %v1515
    %v1586 = vpop.f32.mrb[0].mxu0
    %v1587 = vadd.f32 0.0, %v1586
    %v1588 = vpop.f32.mrb[0].mxu0
    %1589 = vdwg.mxu0
    %v1591 = vsel %vm1361, %v418, 0
    %v1594 = vsel %vm1361, %v35, 0
    %1596 = vmatprep.subr.mxu0 0.0
    %1597 = vmatpush1.xpose.msra.mxu0 %v1594
    %1598 = vmatprep.subr.mxu0 0.0
    %1599 = vmatpush1.xpose.msra.mxu0 0.0
    %1600 = vmatprep.subr.mxu0 0.0
    %1601 = vmatpush1.xpose.msra.mxu0 0.0
    %1602 = vmatprep.subr.mxu0 0.0
    %1603 = vmatpush1.xpose.msra.mxu0 0.0
    %1604 = vmatprep.subr.mxu0 0.0
    %1605 = vmatpush1.xpose.msra.mxu0 0.0
    %1606 = vmatprep.subr.mxu0 0.0
    %1607 = vmatpush1.xpose.msra.mxu0 0.0
    %1608 = vmatprep.subr.mxu0 0.0
    %1609 = vmatpush1.xpose.msra.mxu0 0.0
    %1610 = vmatprep.subr.mxu0 0.0
    %1611 = vmatpush1.xpose.msra.mxu0 0.0
    %1612 = vmatprep.subr.mxu0 0.0
    %1613 = vmatpush1.xpose.msra.mxu0 0.0
    %1614 = vmatprep.subr.mxu0 0.0
    %1615 = vmatpush1.xpose.msra.mxu0 0.0
    %1616 = vmatprep.subr.mxu0 0.0
    %1617 = vmatpush1.xpose.msra.mxu0 0.0
    %1618 = vmatprep.subr.mxu0 0.0
    %1619 = vmatpush1.xpose.msra.mxu0 0.0
    %1620 = vmatprep.subr.mxu0 0.0
    %1621 = vmatpush1.xpose.msra.mxu0 0.0
    %1622 = vmatprep.subr.mxu0 0.0
    %1623 = vmatpush1.xpose.msra.mxu0 0.0
    %1624 = vmatprep.subr.mxu0 0.0
    %1625 = vmatpush1.xpose.msra.mxu0 0.0
    %1626 = vmatprep.subr.mxu0 0.0
    %1627 = vmatpush1.xpose.msra.mxu0 0.0
    %1628 = vmatprep.subr.mxu0 0.0
    %1629 = vmatpush1.xpose.msra.mxu0 0.0
    %1630 = vmatprep.subr.mxu0 0.0
    %1631 = vmatpush1.xpose.msra.mxu0 0.0
    %1632 = vmatprep.subr.mxu0 0.0
    %1633 = vmatpush1.xpose.msra.mxu0 0.0
    %1634 = vmatprep.subr.mxu0 0.0
    %1635 = vmatpush1.xpose.msra.mxu0 0.0
    %1636 = vmatprep.subr.mxu0 0.0
    %1637 = vmatpush1.xpose.msra.mxu0 0.0
    %1638 = vmatprep.subr.mxu0 0.0
    %1639 = vmatpush1.xpose.msra.mxu0 0.0
    %1640 = vmatprep.subr.mxu0 0.0
    %1641 = vmatpush1.xpose.msra.mxu0 0.0
    %1642 = vmatprep.subr.mxu0 0.0
    %1643 = vmatpush1.xpose.msra.mxu0 0.0
    %1644 = vmatprep.subr.mxu0 0.0
    %1645 = vmatpush1.xpose.msra.mxu0 0.0
    %1646 = vmatprep.subr.mxu0 0.0
    %1647 = vmatpush1.xpose.msra.mxu0 0.0
    %1648 = vmatprep.subr.mxu0 0.0
    %1649 = vmatpush1.xpose.msra.mxu0 0.0
    %1650 = vmatprep.subr.mxu0 0.0
    %1651 = vmatpush1.xpose.msra.mxu0 0.0
    %1652 = vmatprep.subr.mxu0 0.0
    %1653 = vmatpush1.xpose.msra.mxu0 0.0
    %1654 = vmatprep.subr.mxu0 0.0
    %1655 = vmatpush1.xpose.msra.mxu0 0.0
    %1656 = vmatprep.subr.mxu0 0.0
    %1657 = vmatpush1.xpose.msra.mxu0 0.0
    %1658 = vmatprep.subr.mxu0 0.0
    %1659 = vmatpush1.xpose.msra.mxu0 0.0
    %1660 = vmatprep.mubr.f32.mxu0 0.0
    %1661 = vmatmul.mubr.f32.gmra.mrb[0].mxu0 %v1591
    %v1662 = vpop.f32.mrb[0].mxu0
    %v1663 = vadd.f32 0.0, %v1662
    %v1664 = vpop.f32.mrb[0].mxu0
    %1665 = vdwg.mxu0
    %v1667 = vsel %vm1361, %v491, 0
    %v1670 = vsel %vm1361, %v36, 0
    %1672 = vmatprep.subr.mxu0 0.0
    %1673 = vmatpush1.xpose.msra.mxu0 %v1670
    %1674 = vmatprep.subr.mxu0 0.0
    %1675 = vmatpush1.xpose.msra.mxu0 0.0
    %1676 = vmatprep.subr.mxu0 0.0
    %1677 = vmatpush1.xpose.msra.mxu0 0.0
    %1678 = vmatprep.subr.mxu0 0.0
    %1679 = vmatpush1.xpose.msra.mxu0 0.0
    %1680 = vmatprep.subr.mxu0 0.0
    %1681 = vmatpush1.xpose.msra.mxu0 0.0
    %1682 = vmatprep.subr.mxu0 0.0
    %1683 = vmatpush1.xpose.msra.mxu0 0.0
    %1684 = vmatprep.subr.mxu0 0.0
    %1685 = vmatpush1.xpose.msra.mxu0 0.0
    %1686 = vmatprep.subr.mxu0 0.0
    %1687 = vmatpush1.xpose.msra.mxu0 0.0
    %1688 = vmatprep.subr.mxu0 0.0
    %1689 = vmatpush1.xpose.msra.mxu0 0.0
    %1690 = vmatprep.subr.mxu0 0.0
    %1691 = vmatpush1.xpose.msra.mxu0 0.0
    %1692 = vmatprep.subr.mxu0 0.0
    %1693 = vmatpush1.xpose.msra.mxu0 0.0
    %1694 = vmatprep.subr.mxu0 0.0
    %1695 = vmatpush1.xpose.msra.mxu0 0.0
    %1696 = vmatprep.subr.mxu0 0.0
    %1697 = vmatpush1.xpose.msra.mxu0 0.0
    %1698 = vmatprep.subr.mxu0 0.0
    %1699 = vmatpush1.xpose.msra.mxu0 0.0
    %1700 = vmatprep.subr.mxu0 0.0
    %1701 = vmatpush1.xpose.msra.mxu0 0.0
    %1702 = vmatprep.subr.mxu0 0.0
    %1703 = vmatpush1.xpose.msra.mxu0 0.0
    %1704 = vmatprep.subr.mxu0 0.0
    %1705 = vmatpush1.xpose.msra.mxu0 0.0
    %1706 = vmatprep.subr.mxu0 0.0
    %1707 = vmatpush1.xpose.msra.mxu0 0.0
    %1708 = vmatprep.subr.mxu0 0.0
    %1709 = vmatpush1.xpose.msra.mxu0 0.0
    %1710 = vmatprep.subr.mxu0 0.0
    %1711 = vmatpush1.xpose.msra.mxu0 0.0
    %1712 = vmatprep.subr.mxu0 0.0
    %1713 = vmatpush1.xpose.msra.mxu0 0.0
    %1714 = vmatprep.subr.mxu0 0.0
    %1715 = vmatpush1.xpose.msra.mxu0 0.0
    %1716 = vmatprep.subr.mxu0 0.0
    %1717 = vmatpush1.xpose.msra.mxu0 0.0
    %1718 = vmatprep.subr.mxu0 0.0
    %1719 = vmatpush1.xpose.msra.mxu0 0.0
    %1720 = vmatprep.subr.mxu0 0.0
    %1721 = vmatpush1.xpose.msra.mxu0 0.0
    %1722 = vmatprep.subr.mxu0 0.0
    %1723 = vmatpush1.xpose.msra.mxu0 0.0
    %1724 = vmatprep.subr.mxu0 0.0
    %1725 = vmatpush1.xpose.msra.mxu0 0.0
    %1726 = vmatprep.subr.mxu0 0.0
    %1727 = vmatpush1.xpose.msra.mxu0 0.0
    %1728 = vmatprep.subr.mxu0 0.0
    %1729 = vmatpush1.xpose.msra.mxu0 0.0
    %1730 = vmatprep.subr.mxu0 0.0
    %1731 = vmatpush1.xpose.msra.mxu0 0.0
    %1732 = vmatprep.subr.mxu0 0.0
    %1733 = vmatpush1.xpose.msra.mxu0 0.0
    %1734 = vmatprep.subr.mxu0 0.0
    %1735 = vmatpush1.xpose.msra.mxu0 0.0
    %1736 = vmatprep.mubr.f32.mxu0 0.0
    %1737 = vmatmul.mubr.f32.gmra.mrb[0].mxu0 %v1667
    %v1738 = vpop.f32.mrb[0].mxu0
    %v1739 = vadd.f32 0.0, %v1738
    %v1740 = vpop.f32.mrb[0].mxu0
    %1741 = vdwg.mxu0
    %v1743 = vsel %vm1361, %v564, 0
    %v1746 = vsel %vm1361, %v37, 0
    %1748 = vmatprep.subr.mxu0 0.0
    %1749 = vmatpush1.xpose.msra.mxu0 %v1746
    %1750 = vmatprep.subr.mxu0 0.0
    %1751 = vmatpush1.xpose.msra.mxu0 0.0
    %1752 = vmatprep.subr.mxu0 0.0
    %1753 = vmatpush1.xpose.msra.mxu0 0.0
    %1754 = vmatprep.subr.mxu0 0.0
    %1755 = vmatpush1.xpose.msra.mxu0 0.0
    %1756 = vmatprep.subr.mxu0 0.0
    %1757 = vmatpush1.xpose.msra.mxu0 0.0
    %1758 = vmatprep.subr.mxu0 0.0
    %1759 = vmatpush1.xpose.msra.mxu0 0.0
    %1760 = vmatprep.subr.mxu0 0.0
    %1761 = vmatpush1.xpose.msra.mxu0 0.0
    %1762 = vmatprep.subr.mxu0 0.0
    %1763 = vmatpush1.xpose.msra.mxu0 0.0
    %1764 = vmatprep.subr.mxu0 0.0
    %1765 = vmatpush1.xpose.msra.mxu0 0.0
    %1766 = vmatprep.subr.mxu0 0.0
    %1767 = vmatpush1.xpose.msra.mxu0 0.0
    %1768 = vmatprep.subr.mxu0 0.0
    %1769 = vmatpush1.xpose.msra.mxu0 0.0
    %1770 = vmatprep.subr.mxu0 0.0
    %1771 = vmatpush1.xpose.msra.mxu0 0.0
    %1772 = vmatprep.subr.mxu0 0.0
    %1773 = vmatpush1.xpose.msra.mxu0 0.0
    %1774 = vmatprep.subr.mxu0 0.0
    %1775 = vmatpush1.xpose.msra.mxu0 0.0
    %1776 = vmatprep.subr.mxu0 0.0
    %1777 = vmatpush1.xpose.msra.mxu0 0.0
    %1778 = vmatprep.subr.mxu0 0.0
    %1779 = vmatpush1.xpose.msra.mxu0 0.0
    %1780 = vmatprep.subr.mxu0 0.0
    %1781 = vmatpush1.xpose.msra.mxu0 0.0
    %1782 = vmatprep.subr.mxu0 0.0
    %1783 = vmatpush1.xpose.msra.mxu0 0.0
    %1784 = vmatprep.subr.mxu0 0.0
    %1785 = vmatpush1.xpose.msra.mxu0 0.0
    %1786 = vmatprep.subr.mxu0 0.0
    %1787 = vmatpush1.xpose.msra.mxu0 0.0
    %1788 = vmatprep.subr.mxu0 0.0
    %1789 = vmatpush1.xpose.msra.mxu0 0.0
    %1790 = vmatprep.subr.mxu0 0.0
    %1791 = vmatpush1.xpose.msra.mxu0 0.0
    %1792 = vmatprep.subr.mxu0 0.0
    %1793 = vmatpush1.xpose.msra.mxu0 0.0
    %1794 = vmatprep.subr.mxu0 0.0
    %1795 = vmatpush1.xpose.msra.mxu0 0.0
    %1796 = vmatprep.subr.mxu0 0.0
    %1797 = vmatpush1.xpose.msra.mxu0 0.0
    %1798 = vmatprep.subr.mxu0 0.0
    %1799 = vmatpush1.xpose.msra.mxu0 0.0
    %1800 = vmatprep.subr.mxu0 0.0
    %1801 = vmatpush1.xpose.msra.mxu0 0.0
    %1802 = vmatprep.subr.mxu0 0.0
    %1803 = vmatpush1.xpose.msra.mxu0 0.0
    %1804 = vmatprep.subr.mxu0 0.0
    %1805 = vmatpush1.xpose.msra.mxu0 0.0
    %1806 = vmatprep.subr.mxu0 0.0
    %1807 = vmatpush1.xpose.msra.mxu0 0.0
    %1808 = vmatprep.subr.mxu0 0.0
    %1809 = vmatpush1.xpose.msra.mxu0 0.0
    %1810 = vmatprep.subr.mxu0 0.0
    %1811 = vmatpush1.xpose.msra.mxu0 0.0
    %1812 = vmatprep.mubr.f32.mxu0 0.0
    %1813 = vmatmul.mubr.f32.gmra.mrb[0].mxu0 %v1743
    %v1814 = vpop.f32.mrb[0].mxu0
    %v1815 = vadd.f32 0.0, %v1814
    %v1816 = vpop.f32.mrb[0].mxu0
    %1817 = vdwg.mxu0
    %v1819 = vsel %vm1361, %v637, 0
    %v1822 = vsel %vm1361, %v38, 0
    %1824 = vmatprep.subr.mxu0 0.0
    %1825 = vmatpush1.xpose.msra.mxu0 %v1822
    %1826 = vmatprep.subr.mxu0 0.0
    %1827 = vmatpush1.xpose.msra.mxu0 0.0
    %1828 = vmatprep.subr.mxu0 0.0
    %1829 = vmatpush1.xpose.msra.mxu0 0.0
    %1830 = vmatprep.subr.mxu0 0.0
    %1831 = vmatpush1.xpose.msra.mxu0 0.0
    %1832 = vmatprep.subr.mxu0 0.0
    %1833 = vmatpush1.xpose.msra.mxu0 0.0
    %1834 = vmatprep.subr.mxu0 0.0
    %1835 = vmatpush1.xpose.msra.mxu0 0.0
    %1836 = vmatprep.subr.mxu0 0.0
    %1837 = vmatpush1.xpose.msra.mxu0 0.0
    %1838 = vmatprep.subr.mxu0 0.0
    %1839 = vmatpush1.xpose.msra.mxu0 0.0
    %1840 = vmatprep.subr.mxu0 0.0
    %1841 = vmatpush1.xpose.msra.mxu0 0.0
    %1842 = vmatprep.subr.mxu0 0.0
    %1843 = vmatpush1.xpose.msra.mxu0 0.0
    %1844 = vmatprep.subr.mxu0 0.0
    %1845 = vmatpush1.xpose.msra.mxu0 0.0
    %1846 = vmatprep.subr.mxu0 0.0
    %1847 = vmatpush1.xpose.msra.mxu0 0.0
    %1848 = vmatprep.subr.mxu0 0.0
    %1849 = vmatpush1.xpose.msra.mxu0 0.0
    %1850 = vmatprep.subr.mxu0 0.0
    %1851 = vmatpush1.xpose.msra.mxu0 0.0
    %1852 = vmatprep.subr.mxu0 0.0
    %1853 = vmatpush1.xpose.msra.mxu0 0.0
    %1854 = vmatprep.subr.mxu0 0.0
    %1855 = vmatpush1.xpose.msra.mxu0 0.0
    %1856 = vmatprep.subr.mxu0 0.0
    %1857 = vmatpush1.xpose.msra.mxu0 0.0
    %1858 = vmatprep.subr.mxu0 0.0
    %1859 = vmatpush1.xpose.msra.mxu0 0.0
    %1860 = vmatprep.subr.mxu0 0.0
    %1861 = vmatpush1.xpose.msra.mxu0 0.0
    %1862 = vmatprep.subr.mxu0 0.0
    %1863 = vmatpush1.xpose.msra.mxu0 0.0
    %1864 = vmatprep.subr.mxu0 0.0
    %1865 = vmatpush1.xpose.msra.mxu0 0.0
    %1866 = vmatprep.subr.mxu0 0.0
    %1867 = vmatpush1.xpose.msra.mxu0 0.0
    %1868 = vmatprep.subr.mxu0 0.0
    %1869 = vmatpush1.xpose.msra.mxu0 0.0
    %1870 = vmatprep.subr.mxu0 0.0
    %1871 = vmatpush1.xpose.msra.mxu0 0.0
    %1872 = vmatprep.subr.mxu0 0.0
    %1873 = vmatpush1.xpose.msra.mxu0 0.0
    %1874 = vmatprep.subr.mxu0 0.0
    %1875 = vmatpush1.xpose.msra.mxu0 0.0
    %1876 = vmatprep.subr.mxu0 0.0
    %1877 = vmatpush1.xpose.msra.mxu0 0.0
    %1878 = vmatprep.subr.mxu0 0.0
    %1879 = vmatpush1.xpose.msra.mxu0 0.0
    %1880 = vmatprep.subr.mxu0 0.0
    %1881 = vmatpush1.xpose.msra.mxu0 0.0
    %1882 = vmatprep.subr.mxu0 0.0
    %1883 = vmatpush1.xpose.msra.mxu0 0.0
    %1884 = vmatprep.subr.mxu0 0.0
    %1885 = vmatpush1.xpose.msra.mxu0 0.0
    %1886 = vmatprep.subr.mxu0 0.0
    %1887 = vmatpush1.xpose.msra.mxu0 0.0
    %1888 = vmatprep.mubr.f32.mxu0 0.0
    %1889 = vmatmul.mubr.f32.gmra.mrb[0].mxu0 %v1819
    %v1890 = vpop.f32.mrb[0].mxu0
    %v1891 = vadd.f32 0.0, %v1890
    %v1892 = vpop.f32.mrb[0].mxu0
    %1893 = vdwg.mxu0
    %v1895 = vsel %vm1361, %v710, 0
    %v1898 = vsel %vm1361, %v39, 0
    %1900 = vmatprep.subr.mxu0 0.0
    %1901 = vmatpush1.xpose.msra.mxu0 %v1898
    %1902 = vmatprep.subr.mxu0 0.0
    %1903 = vmatpush1.xpose.msra.mxu0 0.0
    %1904 = vmatprep.subr.mxu0 0.0
    %1905 = vmatpush1.xpose.msra.mxu0 0.0
    %1906 = vmatprep.subr.mxu0 0.0
    %1907 = vmatpush1.xpose.msra.mxu0 0.0
    %1908 = vmatprep.subr.mxu0 0.0
    %1909 = vmatpush1.xpose.msra.mxu0 0.0
    %1910 = vmatprep.subr.mxu0 0.0
    %1911 = vmatpush1.xpose.msra.mxu0 0.0
    %1912 = vmatprep.subr.mxu0 0.0
    %1913 = vmatpush1.xpose.msra.mxu0 0.0
    %1914 = vmatprep.subr.mxu0 0.0
    %1915 = vmatpush1.xpose.msra.mxu0 0.0
    %1916 = vmatprep.subr.mxu0 0.0
    %1917 = vmatpush1.xpose.msra.mxu0 0.0
    %1918 = vmatprep.subr.mxu0 0.0
    %1919 = vmatpush1.xpose.msra.mxu0 0.0
    %1920 = vmatprep.subr.mxu0 0.0
    %1921 = vmatpush1.xpose.msra.mxu0 0.0
    %1922 = vmatprep.subr.mxu0 0.0
    %1923 = vmatpush1.xpose.msra.mxu0 0.0
    %1924 = vmatprep.subr.mxu0 0.0
    %1925 = vmatpush1.xpose.msra.mxu0 0.0
    %1926 = vmatprep.subr.mxu0 0.0
    %1927 = vmatpush1.xpose.msra.mxu0 0.0
    %1928 = vmatprep.subr.mxu0 0.0
    %1929 = vmatpush1.xpose.msra.mxu0 0.0
    %1930 = vmatprep.subr.mxu0 0.0
    %1931 = vmatpush1.xpose.msra.mxu0 0.0
    %1932 = vmatprep.subr.mxu0 0.0
    %1933 = vmatpush1.xpose.msra.mxu0 0.0
    %1934 = vmatprep.subr.mxu0 0.0
    %1935 = vmatpush1.xpose.msra.mxu0 0.0
    %1936 = vmatprep.subr.mxu0 0.0
    %1937 = vmatpush1.xpose.msra.mxu0 0.0
    %1938 = vmatprep.subr.mxu0 0.0
    %1939 = vmatpush1.xpose.msra.mxu0 0.0
    %1940 = vmatprep.subr.mxu0 0.0
    %1941 = vmatpush1.xpose.msra.mxu0 0.0
    %1942 = vmatprep.subr.mxu0 0.0
    %1943 = vmatpush1.xpose.msra.mxu0 0.0
    %1944 = vmatprep.subr.mxu0 0.0
    %1945 = vmatpush1.xpose.msra.mxu0 0.0
    %1946 = vmatprep.subr.mxu0 0.0
    %1947 = vmatpush1.xpose.msra.mxu0 0.0
    %1948 = vmatprep.subr.mxu0 0.0
    %1949 = vmatpush1.xpose.msra.mxu0 0.0
    %1950 = vmatprep.subr.mxu0 0.0
    %1951 = vmatpush1.xpose.msra.mxu0 0.0
    %1952 = vmatprep.subr.mxu0 0.0
    %1953 = vmatpush1.xpose.msra.mxu0 0.0
    %1954 = vmatprep.subr.mxu0 0.0
    %1955 = vmatpush1.xpose.msra.mxu0 0.0
    %1956 = vmatprep.subr.mxu0 0.0
    %1957 = vmatpush1.xpose.msra.mxu0 0.0
    %1958 = vmatprep.subr.mxu0 0.0
    %1959 = vmatpush1.xpose.msra.mxu0 0.0
    %1960 = vmatprep.subr.mxu0 0.0
    %1961 = vmatpush1.xpose.msra.mxu0 0.0
    %1962 = vmatprep.subr.mxu0 0.0
    %1963 = vmatpush1.xpose.msra.mxu0 0.0
    %1964 = vmatprep.mubr.f32.mxu0 0.0
    %1965 = vmatmul.mubr.f32.gmra.mrb[0].mxu0 %v1895
    %v1966 = vpop.f32.mrb[0].mxu0
    %v1967 = vadd.f32 0.0, %v1966
    %v1968 = vpop.f32.mrb[0].mxu0
    %1969 = vdwg.mxu0
    %v1970 = vlaneseq
    %v1971 = vshrl.u32 %v1970, 7
    %v1972 = vlaneseq
    %v1973 = vand.u32 %v1972, 127
    %vm1974 = vcmp.le.s32.totalorder %v1973, %v1971
    %v1975 = vsel %vm1974, %v1435, -1e+30
    %v1976 = vsel %vm1974, %v1511, -1e+30
    %v1977 = vsel %vm1974, %v1587, -1e+30
    %v1978 = vsel %vm1974, %v1663, -1e+30
    %v1979 = vsel %vm1974, %v1739, -1e+30
    %v1980 = vsel %vm1974, %v1815, -1e+30
    %v1981 = vsel %vm1974, %v1891, -1e+30
    %v1982 = vsel %vm1974, %v1967, -1e+30
    %v1983 = vsel %vm1361, %v1975, -inf
    %1984 = vmax.xlane.f32.xlu0 %v1983
    %v1985 = vpop.xlane.xlu0 %1984
    %v1986 = vsel %vm1361, %v1976, -inf
    %1987 = vmax.xlane.f32.xlu0 %v1986
    %v1988 = vpop.xlane.xlu0 %1987
    %v1989 = vsel %vm1361, %v1977, -inf
    %1990 = vmax.xlane.f32.xlu0 %v1989
    %v1991 = vpop.xlane.xlu0 %1990
    %v1992 = vsel %vm1361, %v1978, -inf
    %1993 = vmax.xlane.f32.xlu0 %v1992
    %v1994 = vpop.xlane.xlu0 %1993
    %v1995 = vsel %vm1361, %v1979, -inf
    %1996 = vmax.xlane.f32.xlu0 %v1995
    %v1997 = vpop.xlane.xlu0 %1996
    %v1998 = vsel %vm1361, %v1980, -inf
    %1999 = vmax.xlane.f32.xlu0 %v1998
    %v2000 = vpop.xlane.xlu0 %1999
    %v2001 = vsel %vm1361, %v1981, -inf
    %2002 = vmax.xlane.f32.xlu0 %v2001
    %v2003 = vpop.xlane.xlu0 %2002
    %v2004 = vsel %vm1361, %v1982, -inf
    %2005 = vmax.xlane.f32.xlu0 %v2004
    %v2006 = vpop.xlane.xlu0 %2005
    %v2007 = vsub.f32 %v1975, %v1985
    %v2008 = vsub.f32 %v1976, %v1988
    %v2009 = vsub.f32 %v1977, %v1991
    %v2010 = vsub.f32 %v1978, %v1994
    %v2011 = vsub.f32 %v1979, %v1997
    %v2012 = vsub.f32 %v1980, %v2000
    %v2013 = vsub.f32 %v1981, %v2003
    %v2014 = vsub.f32 %v1982, %v2006
    %v2015 = vmul.f32 %v2007, 1.442695
    %v2016 = vpow.pop %v2015
    %v2017 = vmul.f32 %v2008, 1.442695
    %v2018 = vpow.pop %v2017
    %v2019 = vmul.f32 %v2009, 1.442695
    %v2020 = vpow.pop %v2019
    %v2021 = vmul.f32 %v2010, 1.442695
    %v2022 = vpow.pop %v2021
    %v2023 = vmul.f32 %v2011, 1.442695
    %v2024 = vpow.pop %v2023
    %v2025 = vmul.f32 %v2012, 1.442695
    %v2026 = vpow.pop %v2025
    %v2027 = vmul.f32 %v2013, 1.442695
    %v2028 = vpow.pop %v2027
    %v2029 = vmul.f32 %v2014, 1.442695
    %v2030 = vpow.pop %v2029
    %v2031 = vsel %vm1361, %v2016, 0.0
    %2032 = vadd.xlane.f32.xlu0 %v2031
    %v2033 = vpop.xlane.xlu0 %2032
    %v2034 = vsel %vm1361, %v2018, 0.0
    %2035 = vadd.xlane.f32.xlu0 %v2034
    %v2036 = vpop.xlane.xlu0 %2035
    %v2037 = vsel %vm1361, %v2020, 0.0
    %2038 = vadd.xlane.f32.xlu0 %v2037
    %v2039 = vpop.xlane.xlu0 %2038
    %v2040 = vsel %vm1361, %v2022, 0.0
    %2041 = vadd.xlane.f32.xlu0 %v2040
    %v2042 = vpop.xlane.xlu0 %2041
    %v2043 = vsel %vm1361, %v2024, 0.0
    %2044 = vadd.xlane.f32.xlu0 %v2043
    %v2045 = vpop.xlane.xlu0 %2044
    %v2046 = vsel %vm1361, %v2026, 0.0
    %2047 = vadd.xlane.f32.xlu0 %v2046
    %v2048 = vpop.xlane.xlu0 %2047
    %v2049 = vsel %vm1361, %v2028, 0.0
    %2050 = vadd.xlane.f32.xlu0 %v2049
    %v2051 = vpop.xlane.xlu0 %2050
    %v2052 = vsel %vm1361, %v2030, 0.0
    %2053 = vadd.xlane.f32.xlu0 %v2052
    %v2054 = vpop.xlane.xlu0 %2053
    %v2055 = vrcp.pop %v2033
    %v2056 = vmul.f32 %v2016, %v2055
    %v2057 = vrcp.pop %v2036
    %v2058 = vmul.f32 %v2018, %v2057
    %v2059 = vrcp.pop %v2039
    %v2060 = vmul.f32 %v2020, %v2059
    %v2061 = vrcp.pop %v2042
    %v2062 = vmul.f32 %v2022, %v2061
    %v2063 = vrcp.pop %v2045
    %v2064 = vmul.f32 %v2024, %v2063
    %v2065 = vrcp.pop %v2048
    %v2066 = vmul.f32 %v2026, %v2065
    %v2067 = vrcp.pop %v2051
    %v2068 = vmul.f32 %v2028, %v2067
    %v2069 = vrcp.pop %v2054
    %v2070 = vmul.f32 %v2030, %v2069
    %v2072 = vsel %vm1361, %v2056, 0
    %2074 = vmatprep.subr.mxu0 0.0
    %2075 = vmatpush1.msra.mxu0 %v868
    %2076 = vmatprep.subr.mxu0 0.0
    %2077 = vmatpush1.msra.mxu0 0.0
    %2078 = vmatprep.subr.mxu0 0.0
    %2079 = vmatpush1.msra.mxu0 0.0
    %2080 = vmatprep.subr.mxu0 0.0
    %2081 = vmatpush1.msra.mxu0 0.0
    %2082 = vmatprep.subr.mxu0 0.0
    %2083 = vmatpush1.msra.mxu0 0.0
    %2084 = vmatprep.subr.mxu0 0.0
    %2085 = vmatpush1.msra.mxu0 0.0
    %2086 = vmatprep.subr.mxu0 0.0
    %2087 = vmatpush1.msra.mxu0 0.0
    %2088 = vmatprep.subr.mxu0 0.0
    %2089 = vmatpush1.msra.mxu0 0.0
    %2090 = vmatprep.subr.mxu0 0.0
    %2091 = vmatpush1.msra.mxu0 0.0
    %2092 = vmatprep.subr.mxu0 0.0
    %2093 = vmatpush1.msra.mxu0 0.0
    %2094 = vmatprep.subr.mxu0 0.0
    %2095 = vmatpush1.msra.mxu0 0.0
    %2096 = vmatprep.subr.mxu0 0.0
    %2097 = vmatpush1.msra.mxu0 0.0
    %2098 = vmatprep.subr.mxu0 0.0
    %2099 = vmatpush1.msra.mxu0 0.0
    %2100 = vmatprep.subr.mxu0 0.0
    %2101 = vmatpush1.msra.mxu0 0.0
    %2102 = vmatprep.subr.mxu0 0.0
    %2103 = vmatpush1.msra.mxu0 0.0
    %2104 = vmatprep.subr.mxu0 0.0
    %2105 = vmatpush1.msra.mxu0 0.0
    %2106 = vmatprep.subr.mxu0 0.0
    %2107 = vmatpush1.msra.mxu0 0.0
    %2108 = vmatprep.subr.mxu0 0.0
    %2109 = vmatpush1.msra.mxu0 0.0
    %2110 = vmatprep.subr.mxu0 0.0
    %2111 = vmatpush1.msra.mxu0 0.0
    %2112 = vmatprep.subr.mxu0 0.0
    %2113 = vmatpush1.msra.mxu0 0.0
    %2114 = vmatprep.subr.mxu0 0.0
    %2115 = vmatpush1.msra.mxu0 0.0
    %2116 = vmatprep.subr.mxu0 0.0
    %2117 = vmatpush1.msra.mxu0 0.0
    %2118 = vmatprep.subr.mxu0 0.0
    %2119 = vmatpush1.msra.mxu0 0.0
    %2120 = vmatprep.subr.mxu0 0.0
    %2121 = vmatpush1.msra.mxu0 0.0
    %2122 = vmatprep.subr.mxu0 0.0
    %2123 = vmatpush1.msra.mxu0 0.0
    %2124 = vmatprep.subr.mxu0 0.0
    %2125 = vmatpush1.msra.mxu0 0.0
    %2126 = vmatprep.subr.mxu0 0.0
    %2127 = vmatpush1.msra.mxu0 0.0
    %2128 = vmatprep.subr.mxu0 0.0
    %2129 = vmatpush1.msra.mxu0 0.0
    %2130 = vmatprep.subr.mxu0 0.0
    %2131 = vmatpush1.msra.mxu0 0.0
    %2132 = vmatprep.subr.mxu0 0.0
    %2133 = vmatpush1.msra.mxu0 0.0
    %2134 = vmatprep.subr.mxu0 0.0
    %2135 = vmatpush1.msra.mxu0 0.0
    %2136 = vmatprep.subr.mxu0 0.0
    %2137 = vmatpush1.msra.mxu0 0.0
    %2138 = vmatprep.mubr.f32.mxu0 0.0
    %2139 = vmatmul.mubr.f32.gmra.mrb[0].mxu0 %v2072
    %v2140 = vpop.f32.mrb[0].mxu0
    %v2141 = vadd.f32 0.0, %v2140
    %v2142 = vpop.f32.mrb[0].mxu0
    %2143 = vdwg.mxu0
    %v2145 = vsel %vm1361, %v2058, 0
    %2147 = vmatprep.subr.mxu0 0.0
    %2148 = vmatpush1.msra.mxu0 %v938
    %2149 = vmatprep.subr.mxu0 0.0
    %2150 = vmatpush1.msra.mxu0 0.0
    %2151 = vmatprep.subr.mxu0 0.0
    %2152 = vmatpush1.msra.mxu0 0.0
    %2153 = vmatprep.subr.mxu0 0.0
    %2154 = vmatpush1.msra.mxu0 0.0
    %2155 = vmatprep.subr.mxu0 0.0
    %2156 = vmatpush1.msra.mxu0 0.0
    %2157 = vmatprep.subr.mxu0 0.0
    %2158 = vmatpush1.msra.mxu0 0.0
    %2159 = vmatprep.subr.mxu0 0.0
    %2160 = vmatpush1.msra.mxu0 0.0
    %2161 = vmatprep.subr.mxu0 0.0
    %2162 = vmatpush1.msra.mxu0 0.0
    %2163 = vmatprep.subr.mxu0 0.0
    %2164 = vmatpush1.msra.mxu0 0.0
    %2165 = vmatprep.subr.mxu0 0.0
    %2166 = vmatpush1.msra.mxu0 0.0
    %2167 = vmatprep.subr.mxu0 0.0
    %2168 = vmatpush1.msra.mxu0 0.0
    %2169 = vmatprep.subr.mxu0 0.0
    %2170 = vmatpush1.msra.mxu0 0.0
    %2171 = vmatprep.subr.mxu0 0.0
    %2172 = vmatpush1.msra.mxu0 0.0
    %2173 = vmatprep.subr.mxu0 0.0
    %2174 = vmatpush1.msra.mxu0 0.0
    %2175 = vmatprep.subr.mxu0 0.0
    %2176 = vmatpush1.msra.mxu0 0.0
    %2177 = vmatprep.subr.mxu0 0.0
    %2178 = vmatpush1.msra.mxu0 0.0
    %2179 = vmatprep.subr.mxu0 0.0
    %2180 = vmatpush1.msra.mxu0 0.0
    %2181 = vmatprep.subr.mxu0 0.0
    %2182 = vmatpush1.msra.mxu0 0.0
    %2183 = vmatprep.subr.mxu0 0.0
    %2184 = vmatpush1.msra.mxu0 0.0
    %2185 = vmatprep.subr.mxu0 0.0
    %2186 = vmatpush1.msra.mxu0 0.0
    %2187 = vmatprep.subr.mxu0 0.0
    %2188 = vmatpush1.msra.mxu0 0.0
    %2189 = vmatprep.subr.mxu0 0.0
    %2190 = vmatpush1.msra.mxu0 0.0
    %2191 = vmatprep.subr.mxu0 0.0
    %2192 = vmatpush1.msra.mxu0 0.0
    %2193 = vmatprep.subr.mxu0 0.0
    %2194 = vmatpush1.msra.mxu0 0.0
    %2195 = vmatprep.subr.mxu0 0.0
    %2196 = vmatpush1.msra.mxu0 0.0
    %2197 = vmatprep.subr.mxu0 0.0
    %2198 = vmatpush1.msra.mxu0 0.0
    %2199 = vmatprep.subr.mxu0 0.0
    %2200 = vmatpush1.msra.mxu0 0.0
    %2201 = vmatprep.subr.mxu0 0.0
    %2202 = vmatpush1.msra.mxu0 0.0
    %2203 = vmatprep.subr.mxu0 0.0
    %2204 = vmatpush1.msra.mxu0 0.0
    %2205 = vmatprep.subr.mxu0 0.0
    %2206 = vmatpush1.msra.mxu0 0.0
    %2207 = vmatprep.subr.mxu0 0.0
    %2208 = vmatpush1.msra.mxu0 0.0
    %2209 = vmatprep.subr.mxu0 0.0
    %2210 = vmatpush1.msra.mxu0 0.0
    %2211 = vmatprep.mubr.f32.mxu0 0.0
    %2212 = vmatmul.mubr.f32.gmra.mrb[0].mxu0 %v2145
    %v2213 = vpop.f32.mrb[0].mxu0
    %v2214 = vadd.f32 0.0, %v2213
    %v2215 = vpop.f32.mrb[0].mxu0
    %2216 = vdwg.mxu0
    %v2218 = vsel %vm1361, %v2060, 0
    %2220 = vmatprep.subr.mxu0 0.0
    %2221 = vmatpush1.msra.mxu0 %v1008
    %2222 = vmatprep.subr.mxu0 0.0
    %2223 = vmatpush1.msra.mxu0 0.0
    %2224 = vmatprep.subr.mxu0 0.0
    %2225 = vmatpush1.msra.mxu0 0.0
    %2226 = vmatprep.subr.mxu0 0.0
    %2227 = vmatpush1.msra.mxu0 0.0
    %2228 = vmatprep.subr.mxu0 0.0
    %2229 = vmatpush1.msra.mxu0 0.0
    %2230 = vmatprep.subr.mxu0 0.0
    %2231 = vmatpush1.msra.mxu0 0.0
    %2232 = vmatprep.subr.mxu0 0.0
    %2233 = vmatpush1.msra.mxu0 0.0
    %2234 = vmatprep.subr.mxu0 0.0
    %2235 = vmatpush1.msra.mxu0 0.0
    %2236 = vmatprep.subr.mxu0 0.0
    %2237 = vmatpush1.msra.mxu0 0.0
    %2238 = vmatprep.subr.mxu0 0.0
    %2239 = vmatpush1.msra.mxu0 0.0
    %2240 = vmatprep.subr.mxu0 0.0
    %2241 = vmatpush1.msra.mxu0 0.0
    %2242 = vmatprep.subr.mxu0 0.0
    %2243 = vmatpush1.msra.mxu0 0.0
    %2244 = vmatprep.subr.mxu0 0.0
    %2245 = vmatpush1.msra.mxu0 0.0
    %2246 = vmatprep.subr.mxu0 0.0
    %2247 = vmatpush1.msra.mxu0 0.0
    %2248 = vmatprep.subr.mxu0 0.0
    %2249 = vmatpush1.msra.mxu0 0.0
    %2250 = vmatprep.subr.mxu0 0.0
    %2251 = vmatpush1.msra.mxu0 0.0
    %2252 = vmatprep.subr.mxu0 0.0
    %2253 = vmatpush1.msra.mxu0 0.0
    %2254 = vmatprep.subr.mxu0 0.0
    %2255 = vmatpush1.msra.mxu0 0.0
    %2256 = vmatprep.subr.mxu0 0.0
    %2257 = vmatpush1.msra.mxu0 0.0
    %2258 = vmatprep.subr.mxu0 0.0
    %2259 = vmatpush1.msra.mxu0 0.0
    %2260 = vmatprep.subr.mxu0 0.0
    %2261 = vmatpush1.msra.mxu0 0.0
    %2262 = vmatprep.subr.mxu0 0.0
    %2263 = vmatpush1.msra.mxu0 0.0
    %2264 = vmatprep.subr.mxu0 0.0
    %2265 = vmatpush1.msra.mxu0 0.0
    %2266 = vmatprep.subr.mxu0 0.0
    %2267 = vmatpush1.msra.mxu0 0.0
    %2268 = vmatprep.subr.mxu0 0.0
    %2269 = vmatpush1.msra.mxu0 0.0
    %2270 = vmatprep.subr.mxu0 0.0
    %2271 = vmatpush1.msra.mxu0 0.0
    %2272 = vmatprep.subr.mxu0 0.0
    %2273 = vmatpush1.msra.mxu0 0.0
    %2274 = vmatprep.subr.mxu0 0.0
    %2275 = vmatpush1.msra.mxu0 0.0
    %2276 = vmatprep.subr.mxu0 0.0
    %2277 = vmatpush1.msra.mxu0 0.0
    %2278 = vmatprep.subr.mxu0 0.0
    %2279 = vmatpush1.msra.mxu0 0.0
    %2280 = vmatprep.subr.mxu0 0.0
    %2281 = vmatpush1.msra.mxu0 0.0
    %2282 = vmatprep.subr.mxu0 0.0
    %2283 = vmatpush1.msra.mxu0 0.0
    %2284 = vmatprep.mubr.f32.mxu0 0.0
    %2285 = vmatmul.mubr.f32.gmra.mrb[0].mxu0 %v2218
    %v2286 = vpop.f32.mrb[0].mxu0
    %v2287 = vadd.f32 0.0, %v2286
    %v2288 = vpop.f32.mrb[0].mxu0
    %2289 = vdwg.mxu0
    %v2291 = vsel %vm1361, %v2062, 0
    %2293 = vmatprep.subr.mxu0 0.0
    %2294 = vmatpush1.msra.mxu0 %v1078
    %2295 = vmatprep.subr.mxu0 0.0
    %2296 = vmatpush1.msra.mxu0 0.0
    %2297 = vmatprep.subr.mxu0 0.0
    %2298 = vmatpush1.msra.mxu0 0.0
    %2299 = vmatprep.subr.mxu0 0.0
    %2300 = vmatpush1.msra.mxu0 0.0
    %2301 = vmatprep.subr.mxu0 0.0
    %2302 = vmatpush1.msra.mxu0 0.0
    %2303 = vmatprep.subr.mxu0 0.0
    %2304 = vmatpush1.msra.mxu0 0.0
    %2305 = vmatprep.subr.mxu0 0.0
    %2306 = vmatpush1.msra.mxu0 0.0
    %2307 = vmatprep.subr.mxu0 0.0
    %2308 = vmatpush1.msra.mxu0 0.0
    %2309 = vmatprep.subr.mxu0 0.0
    %2310 = vmatpush1.msra.mxu0 0.0
    %2311 = vmatprep.subr.mxu0 0.0
    %2312 = vmatpush1.msra.mxu0 0.0
    %2313 = vmatprep.subr.mxu0 0.0
    %2314 = vmatpush1.msra.mxu0 0.0
    %2315 = vmatprep.subr.mxu0 0.0
    %2316 = vmatpush1.msra.mxu0 0.0
    %2317 = vmatprep.subr.mxu0 0.0
    %2318 = vmatpush1.msra.mxu0 0.0
    %2319 = vmatprep.subr.mxu0 0.0
    %2320 = vmatpush1.msra.mxu0 0.0
    %2321 = vmatprep.subr.mxu0 0.0
    %2322 = vmatpush1.msra.mxu0 0.0
    %2323 = vmatprep.subr.mxu0 0.0
    %2324 = vmatpush1.msra.mxu0 0.0
    %2325 = vmatprep.subr.mxu0 0.0
    %2326 = vmatpush1.msra.mxu0 0.0
    %2327 = vmatprep.subr.mxu0 0.0
    %2328 = vmatpush1.msra.mxu0 0.0
    %2329 = vmatprep.subr.mxu0 0.0
    %2330 = vmatpush1.msra.mxu0 0.0
    %2331 = vmatprep.subr.mxu0 0.0
    %2332 = vmatpush1.msra.mxu0 0.0
    %2333 = vmatprep.subr.mxu0 0.0
    %2334 = vmatpush1.msra.mxu0 0.0
    %2335 = vmatprep.subr.mxu0 0.0
    %2336 = vmatpush1.msra.mxu0 0.0
    %2337 = vmatprep.subr.mxu0 0.0
    %2338 = vmatpush1.msra.mxu0 0.0
    %2339 = vmatprep.subr.mxu0 0.0
    %2340 = vmatpush1.msra.mxu0 0.0
    %2341 = vmatprep.subr.mxu0 0.0
    %2342 = vmatpush1.msra.mxu0 0.0
    %2343 = vmatprep.subr.mxu0 0.0
    %2344 = vmatpush1.msra.mxu0 0.0
    %2345 = vmatprep.subr.mxu0 0.0
    %2346 = vmatpush1.msra.mxu0 0.0
    %2347 = vmatprep.subr.mxu0 0.0
    %2348 = vmatpush1.msra.mxu0 0.0
    %2349 = vmatprep.subr.mxu0 0.0
    %2350 = vmatpush1.msra.mxu0 0.0
    %2351 = vmatprep.subr.mxu0 0.0
    %2352 = vmatpush1.msra.mxu0 0.0
    %2353 = vmatprep.subr.mxu0 0.0
    %2354 = vmatpush1.msra.mxu0 0.0
    %2355 = vmatprep.subr.mxu0 0.0
    %2356 = vmatpush1.msra.mxu0 0.0
    %2357 = vmatprep.mubr.f32.mxu0 0.0
    %2358 = vmatmul.mubr.f32.gmra.mrb[0].mxu0 %v2291
    %v2359 = vpop.f32.mrb[0].mxu0
    %v2360 = vadd.f32 0.0, %v2359
    %v2361 = vpop.f32.mrb[0].mxu0
    %2362 = vdwg.mxu0
    %v2364 = vsel %vm1361, %v2064, 0
    %2366 = vmatprep.subr.mxu0 0.0
    %2367 = vmatpush1.msra.mxu0 %v1148
    %2368 = vmatprep.subr.mxu0 0.0
    %2369 = vmatpush1.msra.mxu0 0.0
    %2370 = vmatprep.subr.mxu0 0.0
    %2371 = vmatpush1.msra.mxu0 0.0
    %2372 = vmatprep.subr.mxu0 0.0
    %2373 = vmatpush1.msra.mxu0 0.0
    %2374 = vmatprep.subr.mxu0 0.0
    %2375 = vmatpush1.msra.mxu0 0.0
    %2376 = vmatprep.subr.mxu0 0.0
    %2377 = vmatpush1.msra.mxu0 0.0
    %2378 = vmatprep.subr.mxu0 0.0
    %2379 = vmatpush1.msra.mxu0 0.0
    %2380 = vmatprep.subr.mxu0 0.0
    %2381 = vmatpush1.msra.mxu0 0.0
    %2382 = vmatprep.subr.mxu0 0.0
    %2383 = vmatpush1.msra.mxu0 0.0
    %2384 = vmatprep.subr.mxu0 0.0
    %2385 = vmatpush1.msra.mxu0 0.0
    %2386 = vmatprep.subr.mxu0 0.0
    %2387 = vmatpush1.msra.mxu0 0.0
    %2388 = vmatprep.subr.mxu0 0.0
    %2389 = vmatpush1.msra.mxu0 0.0
    %2390 = vmatprep.subr.mxu0 0.0
    %2391 = vmatpush1.msra.mxu0 0.0
    %2392 = vmatprep.subr.mxu0 0.0
    %2393 = vmatpush1.msra.mxu0 0.0
    %2394 = vmatprep.subr.mxu0 0.0
    %2395 = vmatpush1.msra.mxu0 0.0
    %2396 = vmatprep.subr.mxu0 0.0
    %2397 = vmatpush1.msra.mxu0 0.0
    %2398 = vmatprep.subr.mxu0 0.0
    %2399 = vmatpush1.msra.mxu0 0.0
    %2400 = vmatprep.subr.mxu0 0.0
    %2401 = vmatpush1.msra.mxu0 0.0
    %2402 = vmatprep.subr.mxu0 0.0
    %2403 = vmatpush1.msra.mxu0 0.0
    %2404 = vmatprep.subr.mxu0 0.0
    %2405 = vmatpush1.msra.mxu0 0.0
    %2406 = vmatprep.subr.mxu0 0.0
    %2407 = vmatpush1.msra.mxu0 0.0
    %2408 = vmatprep.subr.mxu0 0.0
    %2409 = vmatpush1.msra.mxu0 0.0
    %2410 = vmatprep.subr.mxu0 0.0
    %2411 = vmatpush1.msra.mxu0 0.0
    %2412 = vmatprep.subr.mxu0 0.0
    %2413 = vmatpush1.msra.mxu0 0.0
    %2414 = vmatprep.subr.mxu0 0.0
    %2415 = vmatpush1.msra.mxu0 0.0
    %2416 = vmatprep.subr.mxu0 0.0
    %2417 = vmatpush1.msra.mxu0 0.0
    %2418 = vmatprep.subr.mxu0 0.0
    %2419 = vmatpush1.msra.mxu0 0.0
    %2420 = vmatprep.subr.mxu0 0.0
    %2421 = vmatpush1.msra.mxu0 0.0
    %2422 = vmatprep.subr.mxu0 0.0
    %2423 = vmatpush1.msra.mxu0 0.0
    %2424 = vmatprep.subr.mxu0 0.0
    %2425 = vmatpush1.msra.mxu0 0.0
    %2426 = vmatprep.subr.mxu0 0.0
    %2427 = vmatpush1.msra.mxu0 0.0
    %2428 = vmatprep.subr.mxu0 0.0
    %2429 = vmatpush1.msra.mxu0 0.0
    %2430 = vmatprep.mubr.f32.mxu0 0.0
    %2431 = vmatmul.mubr.f32.gmra.mrb[0].mxu0 %v2364
    %v2432 = vpop.f32.mrb[0].mxu0
    %v2433 = vadd.f32 0.0, %v2432
    %v2434 = vpop.f32.mrb[0].mxu0
    %2435 = vdwg.mxu0
    %v2437 = vsel %vm1361, %v2066, 0
    %2439 = vmatprep.subr.mxu0 0.0
    %2440 = vmatpush1.msra.mxu0 %v1218
    %2441 = vmatprep.subr.mxu0 0.0
    %2442 = vmatpush1.msra.mxu0 0.0
    %2443 = vmatprep.subr.mxu0 0.0
    %2444 = vmatpush1.msra.mxu0 0.0
    %2445 = vmatprep.subr.mxu0 0.0
    %2446 = vmatpush1.msra.mxu0 0.0
    %2447 = vmatprep.subr.mxu0 0.0
    %2448 = vmatpush1.msra.mxu0 0.0
    %2449 = vmatprep.subr.mxu0 0.0
    %2450 = vmatpush1.msra.mxu0 0.0
    %2451 = vmatprep.subr.mxu0 0.0
    %2452 = vmatpush1.msra.mxu0 0.0
    %2453 = vmatprep.subr.mxu0 0.0
    %2454 = vmatpush1.msra.mxu0 0.0
    %2455 = vmatprep.subr.mxu0 0.0
    %2456 = vmatpush1.msra.mxu0 0.0
    %2457 = vmatprep.subr.mxu0 0.0
    %2458 = vmatpush1.msra.mxu0 0.0
    %2459 = vmatprep.subr.mxu0 0.0
    %2460 = vmatpush1.msra.mxu0 0.0
    %2461 = vmatprep.subr.mxu0 0.0
    %2462 = vmatpush1.msra.mxu0 0.0
    %2463 = vmatprep.subr.mxu0 0.0
    %2464 = vmatpush1.msra.mxu0 0.0
    %2465 = vmatprep.subr.mxu0 0.0
    %2466 = vmatpush1.msra.mxu0 0.0
    %2467 = vmatprep.subr.mxu0 0.0
    %2468 = vmatpush1.msra.mxu0 0.0
    %2469 = vmatprep.subr.mxu0 0.0
    %2470 = vmatpush1.msra.mxu0 0.0
    %2471 = vmatprep.subr.mxu0 0.0
    %2472 = vmatpush1.msra.mxu0 0.0
    %2473 = vmatprep.subr.mxu0 0.0
    %2474 = vmatpush1.msra.mxu0 0.0
    %2475 = vmatprep.subr.mxu0 0.0
    %2476 = vmatpush1.msra.mxu0 0.0
    %2477 = vmatprep.subr.mxu0 0.0
    %2478 = vmatpush1.msra.mxu0 0.0
    %2479 = vmatprep.subr.mxu0 0.0
    %2480 = vmatpush1.msra.mxu0 0.0
    %2481 = vmatprep.subr.mxu0 0.0
    %2482 = vmatpush1.msra.mxu0 0.0
    %2483 = vmatprep.subr.mxu0 0.0
    %2484 = vmatpush1.msra.mxu0 0.0
    %2485 = vmatprep.subr.mxu0 0.0
    %2486 = vmatpush1.msra.mxu0 0.0
    %2487 = vmatprep.subr.mxu0 0.0
    %2488 = vmatpush1.msra.mxu0 0.0
    %2489 = vmatprep.subr.mxu0 0.0
    %2490 = vmatpush1.msra.mxu0 0.0
    %2491 = vmatprep.subr.mxu0 0.0
    %2492 = vmatpush1.msra.mxu0 0.0
    %2493 = vmatprep.subr.mxu0 0.0
    %2494 = vmatpush1.msra.mxu0 0.0
    %2495 = vmatprep.subr.mxu0 0.0
    %2496 = vmatpush1.msra.mxu0 0.0
    %2497 = vmatprep.subr.mxu0 0.0
    %2498 = vmatpush1.msra.mxu0 0.0
    %2499 = vmatprep.subr.mxu0 0.0
    %2500 = vmatpush1.msra.mxu0 0.0
    %2501 = vmatprep.subr.mxu0 0.0
    %2502 = vmatpush1.msra.mxu0 0.0
    %2503 = vmatprep.mubr.f32.mxu0 0.0
    %2504 = vmatmul.mubr.f32.gmra.mrb[0].mxu0 %v2437
    %v2505 = vpop.f32.mrb[0].mxu0
    %v2506 = vadd.f32 0.0, %v2505
    %v2507 = vpop.f32.mrb[0].mxu0
    %2508 = vdwg.mxu0
    %v2510 = vsel %vm1361, %v2068, 0
    %2512 = vmatprep.subr.mxu0 0.0
    %2513 = vmatpush1.msra.mxu0 %v1288
    %2514 = vmatprep.subr.mxu0 0.0
    %2515 = vmatpush1.msra.mxu0 0.0
    %2516 = vmatprep.subr.mxu0 0.0
    %2517 = vmatpush1.msra.mxu0 0.0
    %2518 = vmatprep.subr.mxu0 0.0
    %2519 = vmatpush1.msra.mxu0 0.0
    %2520 = vmatprep.subr.mxu0 0.0
    %2521 = vmatpush1.msra.mxu0 0.0
    %2522 = vmatprep.subr.mxu0 0.0
    %2523 = vmatpush1.msra.mxu0 0.0
    %2524 = vmatprep.subr.mxu0 0.0
    %2525 = vmatpush1.msra.mxu0 0.0
    %2526 = vmatprep.subr.mxu0 0.0
    %2527 = vmatpush1.msra.mxu0 0.0
    %2528 = vmatprep.subr.mxu0 0.0
    %2529 = vmatpush1.msra.mxu0 0.0
    %2530 = vmatprep.subr.mxu0 0.0
    %2531 = vmatpush1.msra.mxu0 0.0
    %2532 = vmatprep.subr.mxu0 0.0
    %2533 = vmatpush1.msra.mxu0 0.0
    %2534 = vmatprep.subr.mxu0 0.0
    %2535 = vmatpush1.msra.mxu0 0.0
    %2536 = vmatprep.subr.mxu0 0.0
    %2537 = vmatpush1.msra.mxu0 0.0
    %2538 = vmatprep.subr.mxu0 0.0
    %2539 = vmatpush1.msra.mxu0 0.0
    %2540 = vmatprep.subr.mxu0 0.0
    %2541 = vmatpush1.msra.mxu0 0.0
    %2542 = vmatprep.subr.mxu0 0.0
    %2543 = vmatpush1.msra.mxu0 0.0
    %2544 = vmatprep.subr.mxu0 0.0
    %2545 = vmatpush1.msra.mxu0 0.0
    %2546 = vmatprep.subr.mxu0 0.0
    %2547 = vmatpush1.msra.mxu0 0.0
    %2548 = vmatprep.subr.mxu0 0.0
    %2549 = vmatpush1.msra.mxu0 0.0
    %2550 = vmatprep.subr.mxu0 0.0
    %2551 = vmatpush1.msra.mxu0 0.0
    %2552 = vmatprep.subr.mxu0 0.0
    %2553 = vmatpush1.msra.mxu0 0.0
    %2554 = vmatprep.subr.mxu0 0.0
    %2555 = vmatpush1.msra.mxu0 0.0
    %2556 = vmatprep.subr.mxu0 0.0
    %2557 = vmatpush1.msra.mxu0 0.0
    %2558 = vmatprep.subr.mxu0 0.0
    %2559 = vmatpush1.msra.mxu0 0.0
    %2560 = vmatprep.subr.mxu0 0.0
    %2561 = vmatpush1.msra.mxu0 0.0
    %2562 = vmatprep.subr.mxu0 0.0
    %2563 = vmatpush1.msra.mxu0 0.0
    %2564 = vmatprep.subr.mxu0 0.0
    %2565 = vmatpush1.msra.mxu0 0.0
    %2566 = vmatprep.subr.mxu0 0.0
    %2567 = vmatpush1.msra.mxu0 0.0
    %2568 = vmatprep.subr.mxu0 0.0
    %2569 = vmatpush1.msra.mxu0 0.0
    %2570 = vmatprep.subr.mxu0 0.0
    %2571 = vmatpush1.msra.mxu0 0.0
    %2572 = vmatprep.subr.mxu0 0.0
    %2573 = vmatpush1.msra.mxu0 0.0
    %2574 = vmatprep.subr.mxu0 0.0
    %2575 = vmatpush1.msra.mxu0 0.0
    %2576 = vmatprep.mubr.f32.mxu0 0.0
    %2577 = vmatmul.mubr.f32.gmra.mrb[0].mxu0 %v2510
    %v2578 = vpop.f32.mrb[0].mxu0
    %v2579 = vadd.f32 0.0, %v2578
    %v2580 = vpop.f32.mrb[0].mxu0
    %2581 = vdwg.mxu0
    %v2583 = vsel %vm1361, %v2070, 0
    %2585 = vmatprep.subr.mxu0 0.0
    %2586 = vmatpush1.msra.mxu0 %v1358
    %2587 = vmatprep.subr.mxu0 0.0
    %2588 = vmatpush1.msra.mxu0 0.0
    %2589 = vmatprep.subr.mxu0 0.0
    %2590 = vmatpush1.msra.mxu0 0.0
    %2591 = vmatprep.subr.mxu0 0.0
    %2592 = vmatpush1.msra.mxu0 0.0
    %2593 = vmatprep.subr.mxu0 0.0
    %2594 = vmatpush1.msra.mxu0 0.0
    %2595 = vmatprep.subr.mxu0 0.0
    %2596 = vmatpush1.msra.mxu0 0.0
    %2597 = vmatprep.subr.mxu0 0.0
    %2598 = vmatpush1.msra.mxu0 0.0
    %2599 = vmatprep.subr.mxu0 0.0
    %2600 = vmatpush1.msra.mxu0 0.0
    %2601 = vmatprep.subr.mxu0 0.0
    %2602 = vmatpush1.msra.mxu0 0.0
    %2603 = vmatprep.subr.mxu0 0.0
    %2604 = vmatpush1.msra.mxu0 0.0
    %2605 = vmatprep.subr.mxu0 0.0
    %2606 = vmatpush1.msra.mxu0 0.0
    %2607 = vmatprep.subr.mxu0 0.0
    %2608 = vmatpush1.msra.mxu0 0.0
    %2609 = vmatprep.subr.mxu0 0.0
    %2610 = vmatpush1.msra.mxu0 0.0
    %2611 = vmatprep.subr.mxu0 0.0
    %2612 = vmatpush1.msra.mxu0 0.0
    %2613 = vmatprep.subr.mxu0 0.0
    %2614 = vmatpush1.msra.mxu0 0.0
    %2615 = vmatprep.subr.mxu0 0.0
    %2616 = vmatpush1.msra.mxu0 0.0
    %2617 = vmatprep.subr.mxu0 0.0
    %2618 = vmatpush1.msra.mxu0 0.0
    %2619 = vmatprep.subr.mxu0 0.0
    %2620 = vmatpush1.msra.mxu0 0.0
    %2621 = vmatprep.subr.mxu0 0.0
    %2622 = vmatpush1.msra.mxu0 0.0
    %2623 = vmatprep.subr.mxu0 0.0
    %2624 = vmatpush1.msra.mxu0 0.0
    %2625 = vmatprep.subr.mxu0 0.0
    %2626 = vmatpush1.msra.mxu0 0.0
    %2627 = vmatprep.subr.mxu0 0.0
    %2628 = vmatpush1.msra.mxu0 0.0
    %2629 = vmatprep.subr.mxu0 0.0
    %2630 = vmatpush1.msra.mxu0 0.0
    %2631 = vmatprep.subr.mxu0 0.0
    %2632 = vmatpush1.msra.mxu0 0.0
    %2633 = vmatprep.subr.mxu0 0.0
    %2634 = vmatpush1.msra.mxu0 0.0
    %2635 = vmatprep.subr.mxu0 0.0
    %2636 = vmatpush1.msra.mxu0 0.0
    %2637 = vmatprep.subr.mxu0 0.0
    %2638 = vmatpush1.msra.mxu0 0.0
    %2639 = vmatprep.subr.mxu0 0.0
    %2640 = vmatpush1.msra.mxu0 0.0
    %2641 = vmatprep.subr.mxu0 0.0
    %2642 = vmatpush1.msra.mxu0 0.0
    %2643 = vmatprep.subr.mxu0 0.0
    %2644 = vmatpush1.msra.mxu0 0.0
    %2645 = vmatprep.subr.mxu0 0.0
    %2646 = vmatpush1.msra.mxu0 0.0
    %2647 = vmatprep.subr.mxu0 0.0
    %2648 = vmatpush1.msra.mxu0 0.0
    %2649 = vmatprep.mubr.f32.mxu0 0.0
    %2650 = vmatmul.mubr.f32.gmra.mrb[0].mxu0 %v2583
    %v2651 = vpop.f32.mrb[0].mxu0
    %v2652 = vadd.f32 0.0, %v2651
    %v2653 = vpop.f32.mrb[0].mxu0
    %2654 = vdwg.mxu0
    %2655 = vst.msk [vmem:[#allocation2] sm:$0xff] %vm1361, %v2141
    %2656 = vst.msk [vmem:[#allocation2 + $0x8] sm:$0xff] %vm1361, %v2214
    %2657 = vst.msk [vmem:[#allocation2 + $0x10] sm:$0xff] %vm1361, %v2287
    %2658 = vst.msk [vmem:[#allocation2 + $0x18] sm:$0xff] %vm1361, %v2360
    %2659 = vst.msk [vmem:[#allocation2 + $0x20] sm:$0xff] %vm1361, %v2433
    %2660 = vst.msk [vmem:[#allocation2 + $0x28] sm:$0xff] %vm1361, %v2506
    %2661 = vst.msk [vmem:[#allocation2 + $0x30] sm:$0xff] %vm1361, %v2579
    %2662 = vst.msk [vmem:[#allocation2 + $0x38] sm:$0xff] %vm1361, %v2652
    // Predicated region
    $region26: #{tpu_custom_call.1} parent=1 // pred_check
      _
    $region27: #{tpu_custom_call.1} parent=1 // pred_check_branch
      %2664 = sbr.rel (0) target = $region29
    $region28: #{tpu_custom_call.1} parent=1 // pred_region
      %s2666 = ssub.s32 1024, 1024
      %2667 = vsyncadd [#allocation3], %s2666
      %s2668 = sshll.u32 [#allocation2], 4
      %s2669 = int_to_ptr.vmem [resolvable:$true] %s2668
      %2674 = dma.vmem_to_hbm [thread:$0]  %s2669, 1024, %s6, [#allocation3], 128, 128, 8
    $region29: #{tpu_custom_call.1} parent=1 // pred_fallthru
      _
    // Predicated region
    $region30: #{tpu_custom_call.1} parent=1 // pred_check
      _
    $region31: #{tpu_custom_call.1} parent=1 // pred_check_branch
      %2676 = sbr.rel (0) target = $region33
    $region32: #{tpu_custom_call.1} parent=1 // pred_region
      %2677 = dma.done [#allocation3], 1024
    $region33: #{tpu_custom_call.1} parent=1 // pred_fallthru
      _
    %2678 = vsyncpa [#allocation3], 1

</llo_original>
